<compile_context>
chip_gen: v5e
topology: v5e:2x2
jax: 0.10.0
libtpu: 0.0.40
codegen_flags: <defaults>
</compile_context>

<pallas_src>
import functools

import jax
import jax.numpy as jnp
from jax import lax
from jax.experimental import pallas as pl
from jax.experimental.pallas import tpu as pltpu


def _cubic_weights(t):
    """PyTorch cubic-convolution coefficients (A = -0.75), t in [0,1)."""
    A = -0.75

    def cc1(x):  # |x| <= 1
        return ((A + 2.0) * x - (A + 3.0)) * x * x + 1.0

    def cc2(x):  # 1 < |x| < 2
        return ((A * x - 5.0 * A) * x + 8.0 * A) * x - 4.0 * A

    return (cc2(t + 1.0), cc1(t), cc1(1.0 - t), cc2(2.0 - t))


def _round_up(a, b):
    return (a + b - 1) // b * b


def _cdiv(a, b):
    return (a + b - 1) // b


def _interp_kernel(pos_ref, x_ref, o_ref, *, H_norm, W_norm, H_in, W_in,
                   K, R, contract_w, mxu_dtype, stage2_dtype):
    """Per-(batch, N-tile) separable bicubic sampling.

    pos_ref: [2, tN]      (row 0 = x coords, row 1 = y coords), lane-dense
    x_ref:   [C*R, K]     features (already MXU dtype); K = MXU-contracted spatial dim
    o_ref:   [C, tN]      sampled channels (transposed, lane-dense)
    """
    C = o_ref.shape[0]
    tn = pos_ref.shape[1]

    pos = pos_ref[...].astype(jnp.float32)          # [2, tN]
    px = pos[0:1, :]                                # [1, tN]
    py = pos[1:2, :]                                # [1, tN]

    # normgrid: map to [-1, 1] with caller-provided H, W (H == 1 or W == 1 is the
    # caller's problem, same as the PyTorch module).
    gx = 2.0 * px / (W_norm - 1.0) - 1.0
    gy = 2.0 * py / (H_norm - 1.0) - 1.0

    # grid_sample unnormalize, align_corners=False, using x's own spatial dims.
    ux = ((gx + 1.0) * W_in - 1.0) * 0.5
    uy = ((gy + 1.0) * H_in - 1.0) * 0.5

    x0 = jnp.floor(ux)
    y0 = jnp.floor(uy)
    wx = _cubic_weights(ux - x0)                    # 4 x [1, tN]
    wy = _cubic_weights(uy - y0)                    # 4 x [1, tN]
    x0i = x0.astype(jnp.int32)
    y0i = y0.astype(jnp.int32)

    if contract_w:           # MXU contracts W; VPU reduces over H
        k0i, wk = x0i, wx
        r0i, wr = y0i, wy
    else:                    # MXU contracts H; VPU reduces over W
        k0i, wk = y0i, wy
        r0i, wr = x0i, wx

    def onehot(size, tap0, w4):
        # The 4 taps tap0..tap0+3 are disjoint -> single nested select, no adds.
        # Out-of-range taps never match the iota (and padded R rows hit zero feature
        # rows), so they contribute exactly 0 == padding_mode='zeros'.
        d = lax.broadcasted_iota(jnp.int32, (size, tn), 0) - tap0
        return jnp.where(d == 0, w4[0],
               jnp.where(d == 1, w4[1],
               jnp.where(d == 2, w4[2],
               jnp.where(d == 3, w4[3], 0.0))))

    ck = onehot(K, k0i - 1, wk)                     # [K, tN]
    rr = onehot(R, r0i - 1, wr)                     # [R, tN]

    # Stage 1 (MXU): contract the larger spatial dim. Slab is already MXU dtype.
    t = jnp.dot(x_ref[...], ck.astype(mxu_dtype),
                preferred_element_type=jnp.float32)          # [C*R, tN]

    # Stage 2 (VPU): per-point weighted sum over the smaller spatial dim.
    # R is a sublane multiple -> this reshape is a pure view.
    t3 = t.reshape(C, R, tn).astype(stage2_dtype)
    prod = t3 * rr.astype(stage2_dtype)[None, :, :]
    out = jnp.sum(prod, axis=1, dtype=jnp.float32)           # [C, tN], f32 accumulate
    o_ref[...] = out.astype(o_ref.dtype)


def interpolate_sparse2d(x, pos, H, W, *, tile_n=None, use_bf16_mxu=True):
    """Pallas equivalent of InterpolateSparse2d(mode='bicubic').forward(x, pos, H, W).

    x:   [B, C, H_in, W_in]  (NCHW, like PyTorch)
    pos: [B, N, 2]           (x, y) pixel coords in the H x W frame
    returns: [B, N, C]
    """
    B, C, H_in, W_in = x.shape
    N = pos.shape[1]

    kind = ""
    try:
        kind = jax.devices()[0].device_kind.lower()
    except Exception:
        pass
    is_v7 = "7" in kind
    pre_v6 = any(f"v{g}" in kind for g in (2, 3, 4, 5))   # no bf16 VALU on <= v5

    mxu_dtype = jnp.bfloat16 if use_bf16_mxu else jnp.float32
    stage2_dtype = jnp.bfloat16 if (use_bf16_mxu and not pre_v6) else jnp.float32

    # Contract the larger spatial dim on the MXU (K); the smaller (R) is the cheap
    # VPU stage-2 reduction.
    contract_w = W_in >= H_in
    if contract_w:
        K, R_raw = W_in, H_in
        x4 = x                                               # [B, C, H_in, W_in]
    else:
        K, R_raw = H_in, W_in
        x4 = jnp.transpose(x, (0, 1, 3, 2))                  # [B, C, W_in, H_in]

    # Pad the non-contracted dim to a sublane multiple so the in-kernel
    # (C*R, tN) -> (C, R, tN) reshape is a pure view. Zero rows contribute exactly 0.
    r_tile = 16 if jnp.dtype(stage2_dtype).itemsize == 2 else 8
    R = _round_up(R_raw, r_tile)
    if R != R_raw:
        x4 = jnp.pad(x4, ((0, 0), (0, 0), (0, R - R_raw), (0, 0)))

    # Feature slab: free reshape + ONE cast to the MXU dtype (hoisted out of kernel).
    x_slab = x4.reshape(B, C * R, K).astype(mxu_dtype)

    # ---- generation-aware VMEM budget and tile_n selection ----
    def vmem_capacity_bytes():
        try:
            cap = getattr(pltpu.get_tpu_info(), "vmem_capacity_bytes", None)
            if cap:
                return int(cap)
        except Exception:
            pass
        return (64 if is_v7 else 128) * 2 ** 20

    budget = int(0.8 * vmem_capacity_bytes())

    x_isz = jnp.dtype(mxu_dtype).itemsize
    o_isz = jnp.dtype(x.dtype).itemsize
    p_isz = jnp.dtype(pos.dtype).itemsize
    s2_isz = jnp.dtype(stage2_dtype).itemsize
    slab_block = (_round_up(C * R, 16 if x_isz == 2 else 8)
                  * _round_up(K, 128) * x_isz)

    def vmem_estimate(tn, slab_bufs):
        io = slab_bufs * slab_block
        io += 2 * _round_up(2, 8) * tn * p_isz                      # pos tiles (2-buf)
        io += 2 * _round_up(C, 8) * tn * o_isz                      # out tiles (2-buf)
        interm = _round_up(K, 8) * tn * 4 + _round_up(K, 16) * tn * 2          # ck + bf16 copy
        interm += _round_up(R, 8) * tn * 4 + _round_up(R, 16) * tn * s2_isz    # rr (+cast)
        interm += _round_up(C * R, 8) * tn * 4                                 # stage-1 result
        interm += C * _round_up(R, 16 if s2_isz == 2 else 8) * tn * s2_isz     # stage-2 product
        interm += 2 * _round_up(C, 8) * tn * 4                                 # sum + out cast
        interm += (_round_up(K, 8) + _round_up(R, 8)) * tn * 4                 # iotas / taps
        return io + interm + (4 << 20)                                          # headroom

    n128 = max(128, _round_up(N, 128))
    if tile_n is None:
        for cand in (512, 256, 128):
            if cand <= n128 and vmem_estimate(cand, 1) <= budget:
                tile_n = cand
                break
        else:
            tile_n = 128
        # v7x has 2 TensorCores/chip: make sure a tiny call still yields >= 2 grid tiles.
        if is_v7:
            while tile_n > 128 and B * _cdiv(N, tile_n) < 2:
                tile_n //= 2
    assert tile_n % 128 == 0

    N_pad = _round_up(max(N, 1), tile_n)

    # pos: [B, N, 2] -> [B, 2, N_pad]  (tiny; keeps all coordinate math lane-dense)
    pos_t = jnp.transpose(pos, (0, 2, 1))
    if N_pad != N:
        pos_t = jnp.pad(pos_t, ((0, 0), (0, 0), (0, N_pad - N)))

    kernel = functools.partial(
        _interp_kernel,
        H_norm=float(H), W_norm=float(W), H_in=H_in, W_in=W_in,
        K=K, R=R, contract_w=contract_w,
        mxu_dtype=mxu_dtype, stage2_dtype=stage2_dtype)

    def build_call(single_buffer_slab):
        slab_kwargs = {}
        if single_buffer_slab:
            # n-invariant block -> single buffer halves slab VMEM (key on v7x's 64 MiB).
            slab_kwargs = dict(pipeline_mode=pl.Buffered(1))
        vmem_limit = int(min(
            budget,
            max(vmem_estimate(tile_n, 1 if single_buffer_slab else 2), 32 * 2 ** 20)))
        # NOTE: if slab + intermediates ever exceed the budget (very large C*H*W on v7x),
        # the right next step is a third 'parallel' grid axis over channel chunks rather
        # than shrinking tile_n.
        return pl.pallas_call(
            kernel,
            out_shape=jax.ShapeDtypeStruct((B, C, N_pad), x.dtype),
            grid_spec=pltpu.PrefetchScalarGridSpec(
                num_scalar_prefetch=0,
                grid=(B, N_pad // tile_n),
                in_specs=[
                    # positions: new tile per (b, n)
                    pl.BlockSpec((None, 2, tile_n), lambda b, n: (b, 0, n)),
                    # feature slab: n-invariant -> stays VMEM-resident across N tiles
                    pl.BlockSpec((None, C * R, K), lambda b, n: (b, 0, 0),
                                 **slab_kwargs),
                ],
                out_specs=pl.BlockSpec((None, C, tile_n), lambda b, n: (b, 0, n)),
            ),
            compiler_params=pltpu.CompilerParams(
                dimension_semantics=("parallel", "parallel"),
                vmem_limit_bytes=vmem_limit),
        )

    try:
        out_t = build_call(True)(pos_t, x_slab)
    except Exception:
        # Fallback for JAX versions without single-buffer (Buffered(1)) support.
        out_t = build_call(False)(pos_t, x_slab)

    # [B, C, N_pad] -> [B, N, C]  (small, result-side only)
    return jnp.transpose(out_t, (0, 2, 1))[:, :N, :]


def _reference_bicubic(x, pos, H, W):
    """Pure-JAX f32 reference (grid_sample bicubic, zeros padding, align_corners=False)."""
    B, C, H_in, W_in = x.shape
    N = pos.shape[1]
    pos = pos.astype(jnp.float32)
    gx = 2.0 * pos[..., 0] / (W - 1.0) - 1.0
    gy = 2.0 * pos[..., 1] / (H - 1.0) - 1.0
    ux = ((gx + 1.0) * W_in - 1.0) * 0.5
    uy = ((gy + 1.0) * H_in - 1.0) * 0.5
    x0 = jnp.floor(ux)
    y0 = jnp.floor(uy)
    wx = _cubic_weights(ux - x0)
    wy = _cubic_weights(uy - y0)
    x0i = x0.astype(jnp.int32)
    y0i = y0.astype(jnp.int32)
    x_flat = x.astype(jnp.float32).reshape(B, C, H_in * W_in)
    out = jnp.zeros((B, N, C), jnp.float32)
    for i in range(4):
        yi = y0i - 1 + i
        vy = (yi >= 0) & (yi < H_in)
        yc = jnp.clip(yi, 0, H_in - 1)
        for j in range(4):
            xi = x0i - 1 + j
            valid = vy & (xi >= 0) & (xi < W_in)
            xc = jnp.clip(xi, 0, W_in - 1)
            idx = jnp.broadcast_to((yc * W_in + xc)[:, None, :], (B, C, N))
            vals = jnp.transpose(jnp.take_along_axis(x_flat, idx, axis=2), (0, 2, 1))
            w = jnp.where(valid, wy[i] * wx[j], 0.0)[..., None]
            out = out + w * vals
    return out


if __name__ == "__main__":
    # Small deterministic example consistent with the module's forward.
    B, C, H, W, N = 2, 4, 16, 16, 8
    key = jax.random.PRNGKey(0)
    kx, kp = jax.random.split(key)

    x = jax.random.normal(kx, (B, C, H, W), dtype=jnp.float32)
    pos = jax.random.uniform(kp, (B, N, 2), dtype=jnp.float32,
                             minval=0.0, maxval=float(W - 1))

    out = interpolate_sparse2d(x, pos, H, W)
    out = jax.block_until_ready(out)
    assert out.shape == (B, N, C)

    # Correctness vs pure-JAX f32 reference (tolerance covers bf16 MXU/stage-2 operands).
    ref = _reference_bicubic(x, pos, H, W)
    max_err = float(jnp.max(jnp.abs(out.astype(jnp.float32) - ref)))
    assert max_err < 8e-2, f"max abs err {max_err}"
    print("KERNEL_OK")
</pallas_src>

<mosaic_0001>
module attributes {stable_mosaic.version = 11 : i64} {
  func.func @_interp_kernel(%arg0: i32, %arg1: i32, %arg2: memref<1x2x128xf32, #tpu.memory_space<vmem>>, %arg3: memref<1x64x16xbf16, #tpu.memory_space<vmem>>, %arg4: memref<1x4x128xf32, #tpu.memory_space<vmem>>) attributes {dimension_semantics = [#tpu.dimension_semantics<parallel>, #tpu.dimension_semantics<parallel>], iteration_bounds = array<i64: 2, 1>, scalar_prefetch = 0 : i64, scratch_operands = 0 : i64, tpu.core_type = #tpu.core_type<tc>, window_params = [{transform_indices = @transform_0, window_bounds = array<i64: 1, 2, 128>}, {pipeline_mode = #tpu.pipeline_mode<synchronous>, transform_indices = @transform_1, window_bounds = array<i64: 1, 64, 16>}, {transform_indices = @transform_2, window_bounds = array<i64: 1, 4, 128>}]} {
    %c0 = arith.constant 0 : index
    %c0_0 = arith.constant 0 : index
    %c0_1 = arith.constant 0 : index
    %0 = vector.load %arg2[%c0, %c0_0, %c0_1] : memref<1x2x128xf32, #tpu.memory_space<vmem>>, vector<1x2x128xf32>
    %1 = vector.shape_cast %0 : vector<1x2x128xf32> to vector<2x128xf32>
    %2 = vector.extract_strided_slice %1 {offsets = [0, 0], sizes = [1, 128], strides = [1, 1]} : vector<2x128xf32> to vector<1x128xf32>
    %3 = vector.extract_strided_slice %1 {offsets = [1, 0], sizes = [1, 128], strides = [1, 1]} : vector<2x128xf32> to vector<1x128xf32>
    %cst = arith.constant 2.000000e+00 : f32
    %4 = vector.broadcast %cst : f32 to vector<1x128xf32>
    %5 = arith.mulf %4, %2 : vector<1x128xf32>
    %cst_2 = arith.constant 1.500000e+01 : f32
    %6 = vector.broadcast %cst_2 : f32 to vector<1x128xf32>
    %7 = arith.divf %5, %6 : vector<1x128xf32>
    %cst_3 = arith.constant 1.000000e+00 : f32
    %8 = vector.broadcast %cst_3 : f32 to vector<1x128xf32>
    %9 = arith.subf %7, %8 : vector<1x128xf32>
    %cst_4 = arith.constant 2.000000e+00 : f32
    %10 = vector.broadcast %cst_4 : f32 to vector<1x128xf32>
    %11 = arith.mulf %10, %3 : vector<1x128xf32>
    %cst_5 = arith.constant 1.500000e+01 : f32
    %12 = vector.broadcast %cst_5 : f32 to vector<1x128xf32>
    %13 = arith.divf %11, %12 : vector<1x128xf32>
    %cst_6 = arith.constant 1.000000e+00 : f32
    %14 = vector.broadcast %cst_6 : f32 to vector<1x128xf32>
    %15 = arith.subf %13, %14 : vector<1x128xf32>
    %cst_7 = arith.constant 1.000000e+00 : f32
    %16 = vector.broadcast %cst_7 : f32 to vector<1x128xf32>
    %17 = arith.addf %9, %16 : vector<1x128xf32>
    %cst_8 = arith.constant 1.600000e+01 : f32
    %18 = vector.broadcast %cst_8 : f32 to vector<1x128xf32>
    %19 = arith.mulf %17, %18 : vector<1x128xf32>
    %cst_9 = arith.constant 1.000000e+00 : f32
    %20 = vector.broadcast %cst_9 : f32 to vector<1x128xf32>
    %21 = arith.subf %19, %20 : vector<1x128xf32>
    %cst_10 = arith.constant 5.000000e-01 : f32
    %22 = vector.broadcast %cst_10 : f32 to vector<1x128xf32>
    %23 = arith.mulf %21, %22 : vector<1x128xf32>
    %cst_11 = arith.constant 1.000000e+00 : f32
    %24 = vector.broadcast %cst_11 : f32 to vector<1x128xf32>
    %25 = arith.addf %15, %24 : vector<1x128xf32>
    %cst_12 = arith.constant 1.600000e+01 : f32
    %26 = vector.broadcast %cst_12 : f32 to vector<1x128xf32>
    %27 = arith.mulf %25, %26 : vector<1x128xf32>
    %cst_13 = arith.constant 1.000000e+00 : f32
    %28 = vector.broadcast %cst_13 : f32 to vector<1x128xf32>
    %29 = arith.subf %27, %28 : vector<1x128xf32>
    %cst_14 = arith.constant 5.000000e-01 : f32
    %30 = vector.broadcast %cst_14 : f32 to vector<1x128xf32>
    %31 = arith.mulf %29, %30 : vector<1x128xf32>
    %32 = math.floor %23 : vector<1x128xf32>
    %33 = math.floor %31 : vector<1x128xf32>
    %34 = arith.subf %23, %32 : vector<1x128xf32>
    %cst_15 = arith.constant 1.000000e+00 : f32
    %35 = vector.broadcast %cst_15 : f32 to vector<1x128xf32>
    %36 = arith.addf %34, %35 : vector<1x128xf32>
    %cst_16 = arith.constant -7.500000e-01 : f32
    %37 = vector.broadcast %cst_16 : f32 to vector<1x128xf32>
    %38 = arith.mulf %37, %36 : vector<1x128xf32>
    %cst_17 = arith.constant -3.750000e+00 : f32
    %39 = vector.broadcast %cst_17 : f32 to vector<1x128xf32>
    %40 = arith.subf %38, %39 : vector<1x128xf32>
    %41 = arith.mulf %40, %36 : vector<1x128xf32>
    %cst_18 = arith.constant -6.000000e+00 : f32
    %42 = vector.broadcast %cst_18 : f32 to vector<1x128xf32>
    %43 = arith.addf %41, %42 : vector<1x128xf32>
    %44 = arith.mulf %43, %36 : vector<1x128xf32>
    %cst_19 = arith.constant -3.000000e+00 : f32
    %45 = vector.broadcast %cst_19 : f32 to vector<1x128xf32>
    %46 = arith.subf %44, %45 : vector<1x128xf32>
    %cst_20 = arith.constant 1.250000e+00 : f32
    %47 = vector.broadcast %cst_20 : f32 to vector<1x128xf32>
    %48 = arith.mulf %47, %34 : vector<1x128xf32>
    %cst_21 = arith.constant 2.250000e+00 : f32
    %49 = vector.broadcast %cst_21 : f32 to vector<1x128xf32>
    %50 = arith.subf %48, %49 : vector<1x128xf32>
    %51 = arith.mulf %50, %34 : vector<1x128xf32>
    %52 = arith.mulf %51, %34 : vector<1x128xf32>
    %cst_22 = arith.constant 1.000000e+00 : f32
    %53 = vector.broadcast %cst_22 : f32 to vector<1x128xf32>
    %54 = arith.addf %52, %53 : vector<1x128xf32>
    %cst_23 = arith.constant 1.000000e+00 : f32
    %55 = vector.broadcast %cst_23 : f32 to vector<1x128xf32>
    %56 = arith.subf %55, %34 : vector<1x128xf32>
    %cst_24 = arith.constant 1.250000e+00 : f32
    %57 = vector.broadcast %cst_24 : f32 to vector<1x128xf32>
    %58 = arith.mulf %57, %56 : vector<1x128xf32>
    %cst_25 = arith.constant 2.250000e+00 : f32
    %59 = vector.broadcast %cst_25 : f32 to vector<1x128xf32>
    %60 = arith.subf %58, %59 : vector<1x128xf32>
    %61 = arith.mulf %60, %56 : vector<1x128xf32>
    %62 = arith.mulf %61, %56 : vector<1x128xf32>
    %cst_26 = arith.constant 1.000000e+00 : f32
    %63 = vector.broadcast %cst_26 : f32 to vector<1x128xf32>
    %64 = arith.addf %62, %63 : vector<1x128xf32>
    %cst_27 = arith.constant 2.000000e+00 : f32
    %65 = vector.broadcast %cst_27 : f32 to vector<1x128xf32>
    %66 = arith.subf %65, %34 : vector<1x128xf32>
    %cst_28 = arith.constant -7.500000e-01 : f32
    %67 = vector.broadcast %cst_28 : f32 to vector<1x128xf32>
    %68 = arith.mulf %67, %66 : vector<1x128xf32>
    %cst_29 = arith.constant -3.750000e+00 : f32
    %69 = vector.broadcast %cst_29 : f32 to vector<1x128xf32>
    %70 = arith.subf %68, %69 : vector<1x128xf32>
    %71 = arith.mulf %70, %66 : vector<1x128xf32>
    %cst_30 = arith.constant -6.000000e+00 : f32
    %72 = vector.broadcast %cst_30 : f32 to vector<1x128xf32>
    %73 = arith.addf %71, %72 : vector<1x128xf32>
    %74 = arith.mulf %73, %66 : vector<1x128xf32>
    %cst_31 = arith.constant -3.000000e+00 : f32
    %75 = vector.broadcast %cst_31 : f32 to vector<1x128xf32>
    %76 = arith.subf %74, %75 : vector<1x128xf32>
    %77 = arith.subf %31, %33 : vector<1x128xf32>
    %cst_32 = arith.constant 1.000000e+00 : f32
    %78 = vector.broadcast %cst_32 : f32 to vector<1x128xf32>
    %79 = arith.addf %77, %78 : vector<1x128xf32>
    %cst_33 = arith.constant -7.500000e-01 : f32
    %80 = vector.broadcast %cst_33 : f32 to vector<1x128xf32>
    %81 = arith.mulf %80, %79 : vector<1x128xf32>
    %cst_34 = arith.constant -3.750000e+00 : f32
    %82 = vector.broadcast %cst_34 : f32 to vector<1x128xf32>
    %83 = arith.subf %81, %82 : vector<1x128xf32>
    %84 = arith.mulf %83, %79 : vector<1x128xf32>
    %cst_35 = arith.constant -6.000000e+00 : f32
    %85 = vector.broadcast %cst_35 : f32 to vector<1x128xf32>
    %86 = arith.addf %84, %85 : vector<1x128xf32>
    %87 = arith.mulf %86, %79 : vector<1x128xf32>
    %cst_36 = arith.constant -3.000000e+00 : f32
    %88 = vector.broadcast %cst_36 : f32 to vector<1x128xf32>
    %89 = arith.subf %87, %88 : vector<1x128xf32>
    %cst_37 = arith.constant 1.250000e+00 : f32
    %90 = vector.broadcast %cst_37 : f32 to vector<1x128xf32>
    %91 = arith.mulf %90, %77 : vector<1x128xf32>
    %cst_38 = arith.constant 2.250000e+00 : f32
    %92 = vector.broadcast %cst_38 : f32 to vector<1x128xf32>
    %93 = arith.subf %91, %92 : vector<1x128xf32>
    %94 = arith.mulf %93, %77 : vector<1x128xf32>
    %95 = arith.mulf %94, %77 : vector<1x128xf32>
    %cst_39 = arith.constant 1.000000e+00 : f32
    %96 = vector.broadcast %cst_39 : f32 to vector<1x128xf32>
    %97 = arith.addf %95, %96 : vector<1x128xf32>
    %cst_40 = arith.constant 1.000000e+00 : f32
    %98 = vector.broadcast %cst_40 : f32 to vector<1x128xf32>
    %99 = arith.subf %98, %77 : vector<1x128xf32>
    %cst_41 = arith.constant 1.250000e+00 : f32
    %100 = vector.broadcast %cst_41 : f32 to vector<1x128xf32>
    %101 = arith.mulf %100, %99 : vector<1x128xf32>
    %cst_42 = arith.constant 2.250000e+00 : f32
    %102 = vector.broadcast %cst_42 : f32 to vector<1x128xf32>
    %103 = arith.subf %101, %102 : vector<1x128xf32>
    %104 = arith.mulf %103, %99 : vector<1x128xf32>
    %105 = arith.mulf %104, %99 : vector<1x128xf32>
    %cst_43 = arith.constant 1.000000e+00 : f32
    %106 = vector.broadcast %cst_43 : f32 to vector<1x128xf32>
    %107 = arith.addf %105, %106 : vector<1x128xf32>
    %cst_44 = arith.constant 2.000000e+00 : f32
    %108 = vector.broadcast %cst_44 : f32 to vector<1x128xf32>
    %109 = arith.subf %108, %77 : vector<1x128xf32>
    %cst_45 = arith.constant -7.500000e-01 : f32
    %110 = vector.broadcast %cst_45 : f32 to vector<1x128xf32>
    %111 = arith.mulf %110, %109 : vector<1x128xf32>
    %cst_46 = arith.constant -3.750000e+00 : f32
    %112 = vector.broadcast %cst_46 : f32 to vector<1x128xf32>
    %113 = arith.subf %111, %112 : vector<1x128xf32>
    %114 = arith.mulf %113, %109 : vector<1x128xf32>
    %cst_47 = arith.constant -6.000000e+00 : f32
    %115 = vector.broadcast %cst_47 : f32 to vector<1x128xf32>
    %116 = arith.addf %114, %115 : vector<1x128xf32>
    %117 = arith.mulf %116, %109 : vector<1x128xf32>
    %cst_48 = arith.constant -3.000000e+00 : f32
    %118 = vector.broadcast %cst_48 : f32 to vector<1x128xf32>
    %119 = arith.subf %117, %118 : vector<1x128xf32>
    %120 = arith.fptosi %32 : vector<1x128xf32> to vector<1x128xi32>
    %121 = arith.fptosi %33 : vector<1x128xf32> to vector<1x128xi32>
    %c1_i32 = arith.constant 1 : i32
    %122 = vector.broadcast %c1_i32 : i32 to vector<1x128xi32>
    %123 = arith.subi %120, %122 : vector<1x128xi32>
    %124 = tpu.iota {dimensions = array<i32: 0>} : vector<16x128xi32>
    %125 = vector.broadcast %123 : vector<1x128xi32> to vector<16x128xi32>
    %126 = arith.subi %124, %125 : vector<16x128xi32>
    %c0_i32 = arith.constant 0 : i32
    %127 = vector.broadcast %c0_i32 : i32 to vector<16x128xi32>
    %128 = arith.cmpi eq, %126, %127 : vector<16x128xi32>
    %c1_i32_49 = arith.constant 1 : i32
    %129 = vector.broadcast %c1_i32_49 : i32 to vector<16x128xi32>
    %130 = arith.cmpi eq, %126, %129 : vector<16x128xi32>
    %c2_i32 = arith.constant 2 : i32
    %131 = vector.broadcast %c2_i32 : i32 to vector<16x128xi32>
    %132 = arith.cmpi eq, %126, %131 : vector<16x128xi32>
    %c3_i32 = arith.constant 3 : i32
    %133 = vector.broadcast %c3_i32 : i32 to vector<16x128xi32>
    %134 = arith.cmpi eq, %126, %133 : vector<16x128xi32>
    %cst_50 = arith.constant 0.000000e+00 : f32
    %135 = vector.shape_cast %76 : vector<1x128xf32> to vector<1x128xf32>
    %136 = vector.broadcast %135 : vector<1x128xf32> to vector<16x128xf32>
    %137 = vector.broadcast %cst_50 : f32 to vector<16x128xf32>
    %138 = arith.select %134, %136, %137 : vector<16x128xi1>, vector<16x128xf32>
    %139 = vector.shape_cast %64 : vector<1x128xf32> to vector<1x128xf32>
    %140 = vector.broadcast %139 : vector<1x128xf32> to vector<16x128xf32>
    %141 = arith.select %132, %140, %138 : vector<16x128xi1>, vector<16x128xf32>
    %142 = vector.shape_cast %54 : vector<1x128xf32> to vector<1x128xf32>
    %143 = vector.broadcast %142 : vector<1x128xf32> to vector<16x128xf32>
    %144 = arith.select %130, %143, %141 : vector<16x128xi1>, vector<16x128xf32>
    %145 = vector.shape_cast %46 : vector<1x128xf32> to vector<1x128xf32>
    %146 = vector.broadcast %145 : vector<1x128xf32> to vector<16x128xf32>
    %147 = arith.select %128, %146, %144 : vector<16x128xi1>, vector<16x128xf32>
    %c1_i32_51 = arith.constant 1 : i32
    %148 = vector.broadcast %c1_i32_51 : i32 to vector<1x128xi32>
    %149 = arith.subi %121, %148 : vector<1x128xi32>
    %150 = tpu.iota {dimensions = array<i32: 0>} : vector<16x128xi32>
    %151 = vector.broadcast %149 : vector<1x128xi32> to vector<16x128xi32>
    %152 = arith.subi %150, %151 : vector<16x128xi32>
    %c0_i32_52 = arith.constant 0 : i32
    %153 = vector.broadcast %c0_i32_52 : i32 to vector<16x128xi32>
    %154 = arith.cmpi eq, %152, %153 : vector<16x128xi32>
    %c1_i32_53 = arith.constant 1 : i32
    %155 = vector.broadcast %c1_i32_53 : i32 to vector<16x128xi32>
    %156 = arith.cmpi eq, %152, %155 : vector<16x128xi32>
    %c2_i32_54 = arith.constant 2 : i32
    %157 = vector.broadcast %c2_i32_54 : i32 to vector<16x128xi32>
    %158 = arith.cmpi eq, %152, %157 : vector<16x128xi32>
    %c3_i32_55 = arith.constant 3 : i32
    %159 = vector.broadcast %c3_i32_55 : i32 to vector<16x128xi32>
    %160 = arith.cmpi eq, %152, %159 : vector<16x128xi32>
    %cst_56 = arith.constant 0.000000e+00 : f32
    %161 = vector.shape_cast %119 : vector<1x128xf32> to vector<1x128xf32>
    %162 = vector.broadcast %161 : vector<1x128xf32> to vector<16x128xf32>
    %163 = vector.broadcast %cst_56 : f32 to vector<16x128xf32>
    %164 = arith.select %160, %162, %163 : vector<16x128xi1>, vector<16x128xf32>
    %165 = vector.shape_cast %107 : vector<1x128xf32> to vector<1x128xf32>
    %166 = vector.broadcast %165 : vector<1x128xf32> to vector<16x128xf32>
    %167 = arith.select %158, %166, %164 : vector<16x128xi1>, vector<16x128xf32>
    %168 = vector.shape_cast %97 : vector<1x128xf32> to vector<1x128xf32>
    %169 = vector.broadcast %168 : vector<1x128xf32> to vector<16x128xf32>
    %170 = arith.select %156, %169, %167 : vector<16x128xi1>, vector<16x128xf32>
    %171 = vector.shape_cast %89 : vector<1x128xf32> to vector<1x128xf32>
    %172 = vector.broadcast %171 : vector<1x128xf32> to vector<16x128xf32>
    %173 = arith.select %154, %172, %170 : vector<16x128xi1>, vector<16x128xf32>
    %c0_57 = arith.constant 0 : index
    %c0_58 = arith.constant 0 : index
    %c0_59 = arith.constant 0 : index
    %174 = vector.load %arg3[%c0_57, %c0_58, %c0_59] : memref<1x64x16xbf16, #tpu.memory_space<vmem>>, vector<1x64x16xbf16>
    %175 = vector.shape_cast %174 : vector<1x64x16xbf16> to vector<64x16xbf16>
    %176 = arith.truncf %147 : vector<16x128xf32> to vector<16x128xbf16>
    %cst_60 = arith.constant dense<0.000000e+00> : vector<64x128xf32>
    %177 = tpu.matmul %175, %176, %cst_60 {dimension_numbers = #tpu.dot_dimension_numbers<[1], [0], [0], [1], [0, 0, 1, 1], [], []>} : vector<64x16xbf16>, vector<16x128xbf16>, vector<64x128xf32> -> vector<64x128xf32>
    %178 = vector.shape_cast %177 : vector<64x128xf32> to vector<4x16x128xf32>
    %179 = arith.truncf %178 : vector<4x16x128xf32> to vector<4x16x128xbf16>
    %180 = arith.truncf %173 : vector<16x128xf32> to vector<16x128xbf16>
    %181 = vector.shape_cast %180 : vector<16x128xbf16> to vector<1x16x128xbf16>
    %182 = vector.broadcast %181 : vector<1x16x128xbf16> to vector<4x16x128xbf16>
    %183 = arith.mulf %179, %182 : vector<4x16x128xbf16>
    %184 = arith.extf %183 : vector<4x16x128xbf16> to vector<4x16x128xf32>
    %cst_61 = arith.constant dense<0.000000e+00> : vector<4x128xf32>
    %185 = vector.multi_reduction <add>, %184, %cst_61 [1] : vector<4x16x128xf32> to vector<4x128xf32>
    %c0_62 = arith.constant 0 : index
    %c0_63 = arith.constant 0 : index
    %c0_64 = arith.constant 0 : index
    %186 = vector.load %arg4[%c0_62, %c0_63, %c0_64] : memref<1x4x128xf32, #tpu.memory_space<vmem>>, vector<1x4x128xf32>
    %187 = vector.shape_cast %186 : vector<1x4x128xf32> to vector<4x128xf32>
    %188 = vector.shape_cast %185 : vector<4x128xf32> to vector<1x4x128xf32>
    tpu.vector_store %arg4[%c0_62, %c0_63, %c0_64], %188 {strides = array<i32>} : memref<1x4x128xf32, #tpu.memory_space<vmem>>, vector<1x4x128xf32>,
    return
  }
  func.func @transform_0(%arg0: i32, %arg1: i32) -> (i32, i32, i32) {
    %c0_i32 = arith.constant 0 : i32
    %c0_i32_0 = arith.constant 0 : i32
    return %arg0, %c0_i32, %arg1 : i32, i32, i32
  }
  func.func @transform_1(%arg0: i32, %arg1: i32) -> (i32, i32, i32) {
    %c0_i32 = arith.constant 0 : i32
    %c0_i32_0 = arith.constant 0 : i32
    %c0_i32_1 = arith.constant 0 : i32
    return %arg0, %c0_i32, %c0_i32_0 : i32, i32, i32
  }
  func.func @transform_2(%arg0: i32, %arg1: i32) -> (i32, i32, i32) {
    %c0_i32 = arith.constant 0 : i32
    %c0_i32_0 = arith.constant 0 : i32
    return %arg0, %c0_i32, %arg1 : i32, i32, i32
  }
}

module attributes {stable_mosaic.version = 11 : i64} {
  func.func @_interp_kernel(%arg0: i32, %arg1: i32, %arg2: memref<1x2x128xf32, #tpu.memory_space<vmem>>, %arg3: memref<1x64x16xbf16, #tpu.memory_space<vmem>>, %arg4: memref<1x4x128xf32, #tpu.memory_space<vmem>>) attributes {dimension_semantics = [#tpu.dimension_semantics<parallel>, #tpu.dimension_semantics<parallel>], iteration_bounds = array<i64: 2, 1>, scalar_prefetch = 0 : i64, scratch_operands = 0 : i64, tpu.core_type = #tpu.core_type<tc>, window_params = [{transform_indices = @transform_0, window_bounds = array<i64: 1, 2, 128>}, {transform_indices = @transform_1, window_bounds = array<i64: 1, 64, 16>}, {transform_indices = @transform_2, window_bounds = array<i64: 1, 4, 128>}]} {
    %c0 = arith.constant 0 : index
    %c0_0 = arith.constant 0 : index
    %c0_1 = arith.constant 0 : index
    %0 = vector.load %arg2[%c0, %c0_0, %c0_1] : memref<1x2x128xf32, #tpu.memory_space<vmem>>, vector<1x2x128xf32>
    %1 = vector.shape_cast %0 : vector<1x2x128xf32> to vector<2x128xf32>
    %2 = vector.extract_strided_slice %1 {offsets = [0, 0], sizes = [1, 128], strides = [1, 1]} : vector<2x128xf32> to vector<1x128xf32>
    %3 = vector.extract_strided_slice %1 {offsets = [1, 0], sizes = [1, 128], strides = [1, 1]} : vector<2x128xf32> to vector<1x128xf32>
    %cst = arith.constant 2.000000e+00 : f32
    %4 = vector.broadcast %cst : f32 to vector<1x128xf32>
    %5 = arith.mulf %4, %2 : vector<1x128xf32>
    %cst_2 = arith.constant 1.500000e+01 : f32
    %6 = vector.broadcast %cst_2 : f32 to vector<1x128xf32>
    %7 = arith.divf %5, %6 : vector<1x128xf32>
    %cst_3 = arith.constant 1.000000e+00 : f32
    %8 = vector.broadcast %cst_3 : f32 to vector<1x128xf32>
    %9 = arith.subf %7, %8 : vector<1x128xf32>
    %cst_4 = arith.constant 2.000000e+00 : f32
    %10 = vector.broadcast %cst_4 : f32 to vector<1x128xf32>
    %11 = arith.mulf %10, %3 : vector<1x128xf32>
    %cst_5 = arith.constant 1.500000e+01 : f32
    %12 = vector.broadcast %cst_5 : f32 to vector<1x128xf32>
    %13 = arith.divf %11, %12 : vector<1x128xf32>
    %cst_6 = arith.constant 1.000000e+00 : f32
    %14 = vector.broadcast %cst_6 : f32 to vector<1x128xf32>
    %15 = arith.subf %13, %14 : vector<1x128xf32>
    %cst_7 = arith.constant 1.000000e+00 : f32
    %16 = vector.broadcast %cst_7 : f32 to vector<1x128xf32>
    %17 = arith.addf %9, %16 : vector<1x128xf32>
    %cst_8 = arith.constant 1.600000e+01 : f32
    %18 = vector.broadcast %cst_8 : f32 to vector<1x128xf32>
    %19 = arith.mulf %17, %18 : vector<1x128xf32>
    %cst_9 = arith.constant 1.000000e+00 : f32
    %20 = vector.broadcast %cst_9 : f32 to vector<1x128xf32>
    %21 = arith.subf %19, %20 : vector<1x128xf32>
    %cst_10 = arith.constant 5.000000e-01 : f32
    %22 = vector.broadcast %cst_10 : f32 to vector<1x128xf32>
    %23 = arith.mulf %21, %22 : vector<1x128xf32>
    %cst_11 = arith.constant 1.000000e+00 : f32
    %24 = vector.broadcast %cst_11 : f32 to vector<1x128xf32>
    %25 = arith.addf %15, %24 : vector<1x128xf32>
    %cst_12 = arith.constant 1.600000e+01 : f32
    %26 = vector.broadcast %cst_12 : f32 to vector<1x128xf32>
    %27 = arith.mulf %25, %26 : vector<1x128xf32>
    %cst_13 = arith.constant 1.000000e+00 : f32
    %28 = vector.broadcast %cst_13 : f32 to vector<1x128xf32>
    %29 = arith.subf %27, %28 : vector<1x128xf32>
    %cst_14 = arith.constant 5.000000e-01 : f32
    %30 = vector.broadcast %cst_14 : f32 to vector<1x128xf32>
    %31 = arith.mulf %29, %30 : vector<1x128xf32>
    %32 = math.floor %23 : vector<1x128xf32>
    %33 = math.floor %31 : vector<1x128xf32>
    %34 = arith.subf %23, %32 : vector<1x128xf32>
    %cst_15 = arith.constant 1.000000e+00 : f32
    %35 = vector.broadcast %cst_15 : f32 to vector<1x128xf32>
    %36 = arith.addf %34, %35 : vector<1x128xf32>
    %cst_16 = arith.constant -7.500000e-01 : f32
    %37 = vector.broadcast %cst_16 : f32 to vector<1x128xf32>
    %38 = arith.mulf %37, %36 : vector<1x128xf32>
    %cst_17 = arith.constant -3.750000e+00 : f32
    %39 = vector.broadcast %cst_17 : f32 to vector<1x128xf32>
    %40 = arith.subf %38, %39 : vector<1x128xf32>
    %41 = arith.mulf %40, %36 : vector<1x128xf32>
    %cst_18 = arith.constant -6.000000e+00 : f32
    %42 = vector.broadcast %cst_18 : f32 to vector<1x128xf32>
    %43 = arith.addf %41, %42 : vector<1x128xf32>
    %44 = arith.mulf %43, %36 : vector<1x128xf32>
    %cst_19 = arith.constant -3.000000e+00 : f32
    %45 = vector.broadcast %cst_19 : f32 to vector<1x128xf32>
    %46 = arith.subf %44, %45 : vector<1x128xf32>
    %cst_20 = arith.constant 1.250000e+00 : f32
    %47 = vector.broadcast %cst_20 : f32 to vector<1x128xf32>
    %48 = arith.mulf %47, %34 : vector<1x128xf32>
    %cst_21 = arith.constant 2.250000e+00 : f32
    %49 = vector.broadcast %cst_21 : f32 to vector<1x128xf32>
    %50 = arith.subf %48, %49 : vector<1x128xf32>
    %51 = arith.mulf %50, %34 : vector<1x128xf32>
    %52 = arith.mulf %51, %34 : vector<1x128xf32>
    %cst_22 = arith.constant 1.000000e+00 : f32
    %53 = vector.broadcast %cst_22 : f32 to vector<1x128xf32>
    %54 = arith.addf %52, %53 : vector<1x128xf32>
    %cst_23 = arith.constant 1.000000e+00 : f32
    %55 = vector.broadcast %cst_23 : f32 to vector<1x128xf32>
    %56 = arith.subf %55, %34 : vector<1x128xf32>
    %cst_24 = arith.constant 1.250000e+00 : f32
    %57 = vector.broadcast %cst_24 : f32 to vector<1x128xf32>
    %58 = arith.mulf %57, %56 : vector<1x128xf32>
    %cst_25 = arith.constant 2.250000e+00 : f32
    %59 = vector.broadcast %cst_25 : f32 to vector<1x128xf32>
    %60 = arith.subf %58, %59 : vector<1x128xf32>
    %61 = arith.mulf %60, %56 : vector<1x128xf32>
    %62 = arith.mulf %61, %56 : vector<1x128xf32>
    %cst_26 = arith.constant 1.000000e+00 : f32
    %63 = vector.broadcast %cst_26 : f32 to vector<1x128xf32>
    %64 = arith.addf %62, %63 : vector<1x128xf32>
    %cst_27 = arith.constant 2.000000e+00 : f32
    %65 = vector.broadcast %cst_27 : f32 to vector<1x128xf32>
    %66 = arith.subf %65, %34 : vector<1x128xf32>
    %cst_28 = arith.constant -7.500000e-01 : f32
    %67 = vector.broadcast %cst_28 : f32 to vector<1x128xf32>
    %68 = arith.mulf %67, %66 : vector<1x128xf32>
    %cst_29 = arith.constant -3.750000e+00 : f32
    %69 = vector.broadcast %cst_29 : f32 to vector<1x128xf32>
    %70 = arith.subf %68, %69 : vector<1x128xf32>
    %71 = arith.mulf %70, %66 : vector<1x128xf32>
    %cst_30 = arith.constant -6.000000e+00 : f32
    %72 = vector.broadcast %cst_30 : f32 to vector<1x128xf32>
    %73 = arith.addf %71, %72 : vector<1x128xf32>
    %74 = arith.mulf %73, %66 : vector<1x128xf32>
    %cst_31 = arith.constant -3.000000e+00 : f32
    %75 = vector.broadcast %cst_31 : f32 to vector<1x128xf32>
    %76 = arith.subf %74, %75 : vector<1x128xf32>
    %77 = arith.subf %31, %33 : vector<1x128xf32>
    %cst_32 = arith.constant 1.000000e+00 : f32
    %78 = vector.broadcast %cst_32 : f32 to vector<1x128xf32>
    %79 = arith.addf %77, %78 : vector<1x128xf32>
    %cst_33 = arith.constant -7.500000e-01 : f32
    %80 = vector.broadcast %cst_33 : f32 to vector<1x128xf32>
    %81 = arith.mulf %80, %79 : vector<1x128xf32>
    %cst_34 = arith.constant -3.750000e+00 : f32
    %82 = vector.broadcast %cst_34 : f32 to vector<1x128xf32>
    %83 = arith.subf %81, %82 : vector<1x128xf32>
    %84 = arith.mulf %83, %79 : vector<1x128xf32>
    %cst_35 = arith.constant -6.000000e+00 : f32
    %85 = vector.broadcast %cst_35 : f32 to vector<1x128xf32>
    %86 = arith.addf %84, %85 : vector<1x128xf32>
    %87 = arith.mulf %86, %79 : vector<1x128xf32>
    %cst_36 = arith.constant -3.000000e+00 : f32
    %88 = vector.broadcast %cst_36 : f32 to vector<1x128xf32>
    %89 = arith.subf %87, %88 : vector<1x128xf32>
    %cst_37 = arith.constant 1.250000e+00 : f32
    %90 = vector.broadcast %cst_37 : f32 to vector<1x128xf32>
    %91 = arith.mulf %90, %77 : vector<1x128xf32>
    %cst_38 = arith.constant 2.250000e+00 : f32
    %92 = vector.broadcast %cst_38 : f32 to vector<1x128xf32>
    %93 = arith.subf %91, %92 : vector<1x128xf32>
    %94 = arith.mulf %93, %77 : vector<1x128xf32>
    %95 = arith.mulf %94, %77 : vector<1x128xf32>
    %cst_39 = arith.constant 1.000000e+00 : f32
    %96 = vector.broadcast %cst_39 : f32 to vector<1x128xf32>
    %97 = arith.addf %95, %96 : vector<1x128xf32>
    %cst_40 = arith.constant 1.000000e+00 : f32
    %98 = vector.broadcast %cst_40 : f32 to vector<1x128xf32>
    %99 = arith.subf %98, %77 : vector<1x128xf32>
    %cst_41 = arith.constant 1.250000e+00 : f32
    %100 = vector.broadcast %cst_41 : f32 to vector<1x128xf32>
    %101 = arith.mulf %100, %99 : vector<1x128xf32>
    %cst_42 = arith.constant 2.250000e+00 : f32
    %102 = vector.broadcast %cst_42 : f32 to vector<1x128xf32>
    %103 = arith.subf %101, %102 : vector<1x128xf32>
    %104 = arith.mulf %103, %99 : vector<1x128xf32>
    %105 = arith.mulf %104, %99 : vector<1x128xf32>
    %cst_43 = arith.constant 1.000000e+00 : f32
    %106 = vector.broadcast %cst_43 : f32 to vector<1x128xf32>
    %107 = arith.addf %105, %106 : vector<1x128xf32>
    %cst_44 = arith.constant 2.000000e+00 : f32
    %108 = vector.broadcast %cst_44 : f32 to vector<1x128xf32>
    %109 = arith.subf %108, %77 : vector<1x128xf32>
    %cst_45 = arith.constant -7.500000e-01 : f32
    %110 = vector.broadcast %cst_45 : f32 to vector<1x128xf32>
    %111 = arith.mulf %110, %109 : vector<1x128xf32>
    %cst_46 = arith.constant -3.750000e+00 : f32
    %112 = vector.broadcast %cst_46 : f32 to vector<1x128xf32>
    %113 = arith.subf %111, %112 : vector<1x128xf32>
    %114 = arith.mulf %113, %109 : vector<1x128xf32>
    %cst_47 = arith.constant -6.000000e+00 : f32
    %115 = vector.broadcast %cst_47 : f32 to vector<1x128xf32>
    %116 = arith.addf %114, %115 : vector<1x128xf32>
    %117 = arith.mulf %116, %109 : vector<1x128xf32>
    %cst_48 = arith.constant -3.000000e+00 : f32
    %118 = vector.broadcast %cst_48 : f32 to vector<1x128xf32>
    %119 = arith.subf %117, %118 : vector<1x128xf32>
    %120 = arith.fptosi %32 : vector<1x128xf32> to vector<1x128xi32>
    %121 = arith.fptosi %33 : vector<1x128xf32> to vector<1x128xi32>
    %c1_i32 = arith.constant 1 : i32
    %122 = vector.broadcast %c1_i32 : i32 to vector<1x128xi32>
    %123 = arith.subi %120, %122 : vector<1x128xi32>
    %124 = tpu.iota {dimensions = array<i32: 0>} : vector<16x128xi32>
    %125 = vector.broadcast %123 : vector<1x128xi32> to vector<16x128xi32>
    %126 = arith.subi %124, %125 : vector<16x128xi32>
    %c0_i32 = arith.constant 0 : i32
    %127 = vector.broadcast %c0_i32 : i32 to vector<16x128xi32>
    %128 = arith.cmpi eq, %126, %127 : vector<16x128xi32>
    %c1_i32_49 = arith.constant 1 : i32
    %129 = vector.broadcast %c1_i32_49 : i32 to vector<16x128xi32>
    %130 = arith.cmpi eq, %126, %129 : vector<16x128xi32>
    %c2_i32 = arith.constant 2 : i32
    %131 = vector.broadcast %c2_i32 : i32 to vector<16x128xi32>
    %132 = arith.cmpi eq, %126, %131 : vector<16x128xi32>
    %c3_i32 = arith.constant 3 : i32
    %133 = vector.broadcast %c3_i32 : i32 to vector<16x128xi32>
    %134 = arith.cmpi eq, %126, %133 : vector<16x128xi32>
    %cst_50 = arith.constant 0.000000e+00 : f32
    %135 = vector.shape_cast %76 : vector<1x128xf32> to vector<1x128xf32>
    %136 = vector.broadcast %135 : vector<1x128xf32> to vector<16x128xf32>
    %137 = vector.broadcast %cst_50 : f32 to vector<16x128xf32>
    %138 = arith.select %134, %136, %137 : vector<16x128xi1>, vector<16x128xf32>
    %139 = vector.shape_cast %64 : vector<1x128xf32> to vector<1x128xf32>
    %140 = vector.broadcast %139 : vector<1x128xf32> to vector<16x128xf32>
    %141 = arith.select %132, %140, %138 : vector<16x128xi1>, vector<16x128xf32>
    %142 = vector.shape_cast %54 : vector<1x128xf32> to vector<1x128xf32>
    %143 = vector.broadcast %142 : vector<1x128xf32> to vector<16x128xf32>
    %144 = arith.select %130, %143, %141 : vector<16x128xi1>, vector<16x128xf32>
    %145 = vector.shape_cast %46 : vector<1x128xf32> to vector<1x128xf32>
    %146 = vector.broadcast %145 : vector<1x128xf32> to vector<16x128xf32>
    %147 = arith.select %128, %146, %144 : vector<16x128xi1>, vector<16x128xf32>
    %c1_i32_51 = arith.constant 1 : i32
    %148 = vector.broadcast %c1_i32_51 : i32 to vector<1x128xi32>
    %149 = arith.subi %121, %148 : vector<1x128xi32>
    %150 = tpu.iota {dimensions = array<i32: 0>} : vector<16x128xi32>
    %151 = vector.broadcast %149 : vector<1x128xi32> to vector<16x128xi32>
    %152 = arith.subi %150, %151 : vector<16x128xi32>
    %c0_i32_52 = arith.constant 0 : i32
    %153 = vector.broadcast %c0_i32_52 : i32 to vector<16x128xi32>
    %154 = arith.cmpi eq, %152, %153 : vector<16x128xi32>
    %c1_i32_53 = arith.constant 1 : i32
    %155 = vector.broadcast %c1_i32_53 : i32 to vector<16x128xi32>
    %156 = arith.cmpi eq, %152, %155 : vector<16x128xi32>
    %c2_i32_54 = arith.constant 2 : i32
    %157 = vector.broadcast %c2_i32_54 : i32 to vector<16x128xi32>
    %158 = arith.cmpi eq, %152, %157 : vector<16x128xi32>
    %c3_i32_55 = arith.constant 3 : i32
    %159 = vector.broadcast %c3_i32_55 : i32 to vector<16x128xi32>
    %160 = arith.cmpi eq, %152, %159 : vector<16x128xi32>
    %cst_56 = arith.constant 0.000000e+00 : f32
    %161 = vector.shape_cast %119 : vector<1x128xf32> to vector<1x128xf32>
    %162 = vector.broadcast %161 : vector<1x128xf32> to vector<16x128xf32>
    %163 = vector.broadcast %cst_56 : f32 to vector<16x128xf32>
    %164 = arith.select %160, %162, %163 : vector<16x128xi1>, vector<16x128xf32>
    %165 = vector.shape_cast %107 : vector<1x128xf32> to vector<1x128xf32>
    %166 = vector.broadcast %165 : vector<1x128xf32> to vector<16x128xf32>
    %167 = arith.select %158, %166, %164 : vector<16x128xi1>, vector<16x128xf32>
    %168 = vector.shape_cast %97 : vector<1x128xf32> to vector<1x128xf32>
    %169 = vector.broadcast %168 : vector<1x128xf32> to vector<16x128xf32>
    %170 = arith.select %156, %169, %167 : vector<16x128xi1>, vector<16x128xf32>
    %171 = vector.shape_cast %89 : vector<1x128xf32> to vector<1x128xf32>
    %172 = vector.broadcast %171 : vector<1x128xf32> to vector<16x128xf32>
    %173 = arith.select %154, %172, %170 : vector<16x128xi1>, vector<16x128xf32>
    %c0_57 = arith.constant 0 : index
    %c0_58 = arith.constant 0 : index
    %c0_59 = arith.constant 0 : index
    %174 = vector.load %arg3[%c0_57, %c0_58, %c0_59] : memref<1x64x16xbf16, #tpu.memory_space<vmem>>, vector<1x64x16xbf16>
    %175 = vector.shape_cast %174 : vector<1x64x16xbf16> to vector<64x16xbf16>
    %176 = arith.truncf %147 : vector<16x128xf32> to vector<16x128xbf16>
    %cst_60 = arith.constant dense<0.000000e+00> : vector<64x128xf32>
    %177 = tpu.matmul %175, %176, %cst_60 {dimension_numbers = #tpu.dot_dimension_numbers<[1], [0], [0], [1], [0, 0, 1, 1], [], []>} : vector<64x16xbf16>, vector<16x128xbf16>, vector<64x128xf32> -> vector<64x128xf32>
    %178 = vector.shape_cast %177 : vector<64x128xf32> to vector<4x16x128xf32>
    %179 = arith.truncf %178 : vector<4x16x128xf32> to vector<4x16x128xbf16>
    %180 = arith.truncf %173 : vector<16x128xf32> to vector<16x128xbf16>
    %181 = vector.shape_cast %180 : vector<16x128xbf16> to vector<1x16x128xbf16>
    %182 = vector.broadcast %181 : vector<1x16x128xbf16> to vector<4x16x128xbf16>
    %183 = arith.mulf %179, %182 : vector<4x16x128xbf16>
    %184 = arith.extf %183 : vector<4x16x128xbf16> to vector<4x16x128xf32>
    %cst_61 = arith.constant dense<0.000000e+00> : vector<4x128xf32>
    %185 = vector.multi_reduction <add>, %184, %cst_61 [1] : vector<4x16x128xf32> to vector<4x128xf32>
    %c0_62 = arith.constant 0 : index
    %c0_63 = arith.constant 0 : index
    %c0_64 = arith.constant 0 : index
    %186 = vector.load %arg4[%c0_62, %c0_63, %c0_64] : memref<1x4x128xf32, #tpu.memory_space<vmem>>, vector<1x4x128xf32>
    %187 = vector.shape_cast %186 : vector<1x4x128xf32> to vector<4x128xf32>
    %188 = vector.shape_cast %185 : vector<4x128xf32> to vector<1x4x128xf32>
    tpu.vector_store %arg4[%c0_62, %c0_63, %c0_64], %188 {strides = array<i32>} : memref<1x4x128xf32, #tpu.memory_space<vmem>>, vector<1x4x128xf32>,
    return
  }
  func.func @transform_0(%arg0: i32, %arg1: i32) -> (i32, i32, i32) {
    %c0_i32 = arith.constant 0 : i32
    %c0_i32_0 = arith.constant 0 : i32
    return %arg0, %c0_i32, %arg1 : i32, i32, i32
  }
  func.func @transform_1(%arg0: i32, %arg1: i32) -> (i32, i32, i32) {
    %c0_i32 = arith.constant 0 : i32
    %c0_i32_0 = arith.constant 0 : i32
    %c0_i32_1 = arith.constant 0 : i32
    return %arg0, %c0_i32, %c0_i32_0 : i32, i32, i32
  }
  func.func @transform_2(%arg0: i32, %arg1: i32) -> (i32, i32, i32) {
    %c0_i32 = arith.constant 0 : i32
    %c0_i32_0 = arith.constant 0 : i32
    return %arg0, %c0_i32, %arg1 : i32, i32, i32
  }
}

</mosaic_0001>

<llo_original>
// kernel: tpu_custom_call.1
$region0: #{tpu_custom_call.1}
  #allocation0 [shape = 'u32[]', space=smem, size = 0x4, offset = 0x4, fixed_abs, tag = 'smem constant byte address 0x4 - core index']
  #allocation1 [shape = 'u32[72,128]{1,0:T(1,128)}', space=vmem, size = 0x9000, scoped, tag = 'internal scratch']
  %s0 = inlined_call_operand.vmem [shape: f32[2,2,128], index: 0, kind: input, shape index: {}]
  %s1 = inlined_call_operand.vmem [shape: bf16[2,64,16], index: 1, kind: input, shape index: {}]
  %s2 = inlined_call_operand.hbm [shape: f32[2,4,128], index: 2, kind: output, shape index: {}]
  %s3 = sld [smem:[#allocation0]]
  $region41: #{tpu_custom_call.1} parent=0
    _
  %s5 = ssub.s32 1, %s3
  %s6 = scalar_select 0, %s5, %s3
  $region1: #{tpu_custom_call.1} parent=0
    #allocation2 [shape = 'u8[4096]{0}', space=vmem, size = 0x1000, scoped, tag = 'output window, operand 0']
    #allocation3 [shape = 's32[2]{0}', space=sflag, size = 0x8, scoped, tag = 'scoped memory for tpu_custom_call.1']
    %7 = vsyncpa [#allocation3], 0
    %s8 = scalar_lea.sflag [#allocation3], 1
    %9 = vsyncpa %s8, 0
    loop: start=0, step=1, limit=4
    $region2: #{tpu_custom_call.1} parent=1 // loop_pre_header
      _
    $region3: #{tpu_custom_call.1} parent=1 // loop_header
      %s11 = sphi 0, %s15
      %p12 = scmp.ge.s32.totalorder %s11, 4
      %s18 = sphi 0, %s30
      %s19 = sphi 0, %s26
      %s20 = sphi 0, %s18
      %s21 = sphi 0, %s19
      %s22 = sphi 0, %s20
      %s23 = sphi 0, %s21
      %s35 = sphi 0, %s37
      %s38 = sphi 0, %s35
      %s39 = sphi 0, %s38
      %s55 = sphi 0, %s39
      %s61 = sphi 0, %s63
      %s64 = sphi 0, %s61
      %s65 = sphi 0, %s64
      %s81 = sphi 0, %s65
      %s89 = sphi 0, %s91
      %s92 = sphi 0, %s89
      %s93 = sphi 0, %s92
      %s109 = sphi 0, %s93
    $region4: #{tpu_custom_call.1} parent=1 // loop_header_branch
      %14 = sbr.rel (%p12) target = $region8
    $region5: #{tpu_custom_call.1} parent=1 // loop_body
      %s16 = ssub.s32 %s11, 1
      %s17 = ssub.s32 %s11, 2
      %s24 = sadd.s32 1, %s19
      %p25 = scmp.ge.s32.totalorder %s24, 1
      %s26 = scalar_select %p25, 0, %s24
      %s27 = sadd.s32 1, %s18
      %s28 = scalar_select %p25, %s27, %s18
      %p29 = scmp.ge.s32.totalorder %s28, 2
      %s30 = scalar_select %p29, 0, %s28
      %s31 = ssub.s32 %s18, %s30
      %s32 = ssub.s32 %s19, %s26
      %s33 = sor.u32 %s31, %s32
      %p34 = scmp.eq.s32.totalorder %s33, 0
      %s36 = sadd.s32 %s35, 1
      %s37 = scalar_select %p34, %s35, %s36
      %p40 = pneg %p34
      %p41 = scmp.eq.s32.totalorder %s11, 1
      %p42 = por %p40, %p41
      %p43 = scmp.ne.s32.totalorder %s35, %s38
      %p44 = scmp.eq.s32.totalorder %s11, 0
      %p45 = por %p43, %p44
      %p46 = scmp.ne.s32.totalorder %s35, %s38
      %p47 = scmp.eq.s32.totalorder %s16, 1
      %p48 = por %p46, %p47
      %p49 = scmp.ne.s32.totalorder %s38, %s39
      %p50 = scmp.eq.s32.totalorder %s16, 0
      %p51 = por %p49, %p50
      %p52 = scmp.ne.s32.totalorder %s38, %s39
      %p53 = scmp.eq.s32.totalorder %s17, 1
      %p54 = por %p52, %p53
      %p56 = scmp.ne.s32.totalorder %s39, %s55
      %p57 = scmp.eq.s32.totalorder %s17, 0
      %p58 = por %p56, %p57
      %s59 = ssub.s32 %s18, %s30
      %p60 = scmp.eq.s32.totalorder %s59, 0
      %s62 = sadd.s32 %s61, 1
      %s63 = scalar_select %p60, %s61, %s62
      %p66 = pneg %p60
      %p67 = scmp.eq.s32.totalorder %s11, 1
      %p68 = por %p66, %p67
      %p69 = scmp.ne.s32.totalorder %s61, %s64
      %p70 = scmp.eq.s32.totalorder %s11, 0
      %p71 = por %p69, %p70
      %p72 = scmp.ne.s32.totalorder %s61, %s64
      %p73 = scmp.eq.s32.totalorder %s16, 1
      %p74 = por %p72, %p73
      %p75 = scmp.ne.s32.totalorder %s64, %s65
      %p76 = scmp.eq.s32.totalorder %s16, 0
      %p77 = por %p75, %p76
      %p78 = scmp.ne.s32.totalorder %s64, %s65
      %p79 = scmp.eq.s32.totalorder %s17, 1
      %p80 = por %p78, %p79
      %p82 = scmp.ne.s32.totalorder %s65, %s81
      %p83 = scmp.eq.s32.totalorder %s17, 0
      %p84 = por %p82, %p83
      %s85 = ssub.s32 %s18, %s30
      %s86 = ssub.s32 %s19, %s26
      %s87 = sor.u32 %s85, %s86
      %p88 = scmp.eq.s32.totalorder %s87, 0
      %s90 = sadd.s32 %s89, 1
      %s91 = scalar_select %p88, %s89, %s90
      %p94 = pneg %p88
      %p95 = scmp.eq.s32.totalorder %s11, 1
      %p96 = por %p94, %p95
      %p97 = scmp.ne.s32.totalorder %s89, %s92
      %p98 = scmp.eq.s32.totalorder %s11, 0
      %p99 = por %p97, %p98
      %p100 = scmp.ne.s32.totalorder %s89, %s92
      %p101 = scmp.eq.s32.totalorder %s16, 1
      %p102 = por %p100, %p101
      %p103 = scmp.ne.s32.totalorder %s92, %s93
      %p104 = scmp.eq.s32.totalorder %s16, 0
      %p105 = por %p103, %p104
      %p106 = scmp.ne.s32.totalorder %s92, %s93
      %p107 = scmp.eq.s32.totalorder %s17, 1
      %p108 = por %p106, %p107
      %p110 = scmp.ne.s32.totalorder %s93, %s109
      %p111 = scmp.eq.s32.totalorder %s17, 0
      %p112 = por %p110, %p111
      %p113 = scmp.le.s32.totalorder 1, %s11
      %p114 = scmp.lt.s32.totalorder %s11, 3
      %p115 = pnand %p113, %p114
      %p116 = pneg %p115
      // Predicated region
      $region9: #{tpu_custom_call.1} parent=5 // pred_check
        _
      $region10: #{tpu_custom_call.1} parent=5 // pred_check_branch
        %118 = sbr.rel (%p115) target = $region12
      $region11: #{tpu_custom_call.1} parent=5 // pred_region
        %s119 = ssub.s32 %s11, 1
        // Predicated region
        $region13: #{tpu_custom_call.1} parent=11 // pred_check
          %p120 = pneg %p77
        $region14: #{tpu_custom_call.1} parent=11 // pred_check_branch
          %122 = sbr.rel (%p120) target = $region16
        $region15: #{tpu_custom_call.1} parent=11 // pred_region
          %p123 = scmp.lt.s32.totalorder %s20, 1
          %s124 = scalar_select %p123, %s20, 1
          %s125 = smul.addr %s124, 8
          %s126 = smul.addr %s125, 4
          %s127 = scalar_lea.vmem %s1, %s126
        $region16: #{tpu_custom_call.1} parent=11 // pred_fallthru
          _
      $region12: #{tpu_custom_call.1} parent=5 // pred_fallthru
        _
      %p128 = scmp.lt.s32.totalorder %s11, 2
      // Predicated region
      $region17: #{tpu_custom_call.1} parent=5 // pred_check
        %p129 = pneg %p128
      $region18: #{tpu_custom_call.1} parent=5 // pred_check_branch
        %131 = sbr.rel (%p129) target = $region20
      $region19: #{tpu_custom_call.1} parent=5 // pred_region
        // Predicated region
        $region21: #{tpu_custom_call.1} parent=19 // pred_check
          %p132 = pneg %p45
        $region22: #{tpu_custom_call.1} parent=19 // pred_check_branch
          %134 = sbr.rel (%p132) target = $region24
        $region23: #{tpu_custom_call.1} parent=19 // pred_region
          %p135 = scmp.lt.s32.totalorder %s18, 1
          %s136 = scalar_select %p135, %s18, 1
          %p137 = scmp.lt.s32.totalorder %s19, 0
          %s138 = scalar_select %p137, %s19, 0
          %s139 = sadd.s32 %s138, %s136
          %s140 = smul.addr %s139, 2
          %s141 = scalar_lea.vmem %s0, %s140
        $region24: #{tpu_custom_call.1} parent=19 // pred_fallthru
          _
      $region20: #{tpu_custom_call.1} parent=5 // pred_fallthru
        _
      %p142 = scmp.le.s32.totalorder 1, %s11
      %p143 = scmp.lt.s32.totalorder %s11, 3
      %p144 = pnand %p142, %p143
      %p145 = pneg %p144
      // Predicated region
      $region25: #{tpu_custom_call.1} parent=5 // pred_check
        _
      $region26: #{tpu_custom_call.1} parent=5 // pred_check_branch
        %147 = sbr.rel (%p144) target = $region28
      $region27: #{tpu_custom_call.1} parent=5 // pred_region
        %s148 = ssub.s32 %s11, 1
        %p149 = scmp.lt.s32.totalorder %s20, 1
        %s150 = scalar_select %p149, %s20, 1
        %p151 = scmp.lt.s32.totalorder %s21, 0
        %s152 = scalar_select %p151, %s21, 0
        %s153 = sadd.s32 %s152, %s150
        %s154 = smul.addr %s153, 2
        %s155 = scalar_lea.vmem %s0, %s154
        %p156 = pneg %p51
        %p157 = pneg %p48
        %p158 = scmp.lt.s32.totalorder %s20, 1
        %s159 = scalar_select %p158, %s20, 1
        %s160 = smul.addr %s159, 8
        %s161 = smul.addr %s160, 4
        %s162 = scalar_lea.vmem %s1, %s161
        %p163 = pneg %p77
        %p164 = pneg %p74
        %p165 = pneg %p105
        %p166 = pneg %p102
        %s167 = sand.u32 %s92, 1
        %s168 = scalar_lea.sflag [#allocation3], %s167
        %s169 = sand.u32 %s92, 1
        %s170 = smul.addr %s169, 4
        %s171 = scalar_lea.vmem [#allocation2], %s170
        %p172 = scmp.lt.s32.totalorder %s20, 1
        %s173 = scalar_select %p172, %s20, 1
        %p174 = scmp.lt.s32.totalorder %s21, 0
        %s175 = scalar_select %p174, %s21, 0
        %s176 = sadd.s32 %s175, %s173
        %s177 = smul.addr %s176, 2
        %s178 = scalar_lea.vmem %s0, %s177
        %p179 = scmp.lt.s32.totalorder %s20, 1
        %s180 = scalar_select %p179, %s20, 1
        %s181 = smul.addr %s180, 8
        %s182 = smul.addr %s181, 4
        %s183 = scalar_lea.vmem %s1, %s182
        %v185 = vld [vmem:[%s178] sm:$0x3]
        %v186 = vmul.f32 %v185, 2.0
        %v187 = vrcp.pop 15.0
        %v188 = vmul.f32 15.0, %v187
        %v189 = vsub.f32 1.0, %v188
        %v190 = vmul.f32 %v187, %v189
        %v191 = vadd.f32 %v187, %v190
        %vm192 = vweird.f32 %v187
        %v193 = vsel %vm192, %v187, %v191
        %v194 = vmul.f32 %v186, %v193
        %v195 = vsub.f32 %v194, 1.0
        %v196 = vadd.f32 %v195, 1.0
        %v197 = vmul.f32 %v196, 16.0
        %v198 = vsub.f32 %v197, 1.0
        %v199 = vmul.f32 %v198, 0.5
        %v200 = vfloor.f32 %v199
        %v201 = vsub.f32 %v199, %v200
        %v202 = vadd.f32 %v201, 1.0
        %v203 = vmul.f32 %v202, -0.75
        %v204 = vsub.f32 %v203, -3.75
        %v205 = vmul.f32 %v204, %v202
        %v206 = vadd.f32 %v205, -6.0
        %v207 = vmul.f32 %v206, %v202
        %v208 = vsub.f32 %v207, -3.0
        %v209 = vmul.f32 %v201, 1.25
        %v210 = vsub.f32 %v209, 2.25
        %v211 = vmul.f32 %v210, %v201
        %v212 = vmul.f32 %v211, %v201
        %v213 = vadd.f32 %v212, 1.0
        %v214 = vsub.f32 1.0, %v201
        %v215 = vmul.f32 %v214, 1.25
        %v216 = vsub.f32 %v215, 2.25
        %v217 = vmul.f32 %v216, %v214
        %v218 = vmul.f32 %v217, %v214
        %v219 = vadd.f32 %v218, 1.0
        %v220 = vsub.f32 2.0, %v201
        %v221 = vmul.f32 %v220, -0.75
        %v222 = vsub.f32 %v221, -3.75
        %v223 = vmul.f32 %v222, %v220
        %v224 = vadd.f32 %v223, -6.0
        %v225 = vmul.f32 %v224, %v220
        %v226 = vsub.f32 %v225, -3.0
        %v227 = vcvt.f32.s32.to.zero.pseudo %v200
        %v228 = vsub.s32 %v227, 1
        %v229 = vlaneseq
        %v230 = vshrl.u32 %v229, 7
        %v231 = vadd.s32 %v230, 8
        %v232 = vperm.slane %v228, 0
        %v233 = vsub.s32 %v230, %v232
        %v234 = vsub.s32 %v231, %v232
        %vm235 = vcmp.eq.s32.totalorder %v233, 0
        %vm236 = vcmp.eq.s32.totalorder %v234, 0
        %vm237 = vcmp.eq.s32.totalorder %v233, 1
        %vm238 = vcmp.eq.s32.totalorder %v234, 1
        %vm239 = vcmp.eq.s32.totalorder %v233, 2
        %vm240 = vcmp.eq.s32.totalorder %v234, 2
        %vm241 = vcmp.eq.s32.totalorder %v233, 3
        %vm242 = vcmp.eq.s32.totalorder %v234, 3
        %v243 = vperm.slane %v226, 0
        %v244 = vsel %vm241, %v243, 0.0
        %v245 = vsel %vm242, %v243, 0.0
        %v246 = vperm.slane %v219, 0
        %v247 = vsel %vm239, %v246, %v244
        %v248 = vsel %vm240, %v246, %v245
        %v249 = vperm.slane %v213, 0
        %v250 = vsel %vm237, %v249, %v247
        %v251 = vsel %vm238, %v249, %v248
        %v252 = vperm.slane %v208, 0
        %v253 = vsel %vm235, %v252, %v250
        %v254 = vsel %vm236, %v252, %v251
        %v255 = vperm.slane %v228, 1
        %v256 = vsub.s32 %v230, %v255
        %v257 = vsub.s32 %v231, %v255
        %vm258 = vcmp.eq.s32.totalorder %v256, 0
        %vm259 = vcmp.eq.s32.totalorder %v257, 0
        %vm260 = vcmp.eq.s32.totalorder %v256, 1
        %vm261 = vcmp.eq.s32.totalorder %v257, 1
        %vm262 = vcmp.eq.s32.totalorder %v256, 2
        %vm263 = vcmp.eq.s32.totalorder %v257, 2
        %vm264 = vcmp.eq.s32.totalorder %v256, 3
        %vm265 = vcmp.eq.s32.totalorder %v257, 3
        %v266 = vperm.slane %v226, 1
        %v267 = vsel %vm264, %v266, 0.0
        %v268 = vsel %vm265, %v266, 0.0
        %v269 = vperm.slane %v219, 1
        %v270 = vsel %vm262, %v269, %v267
        %v271 = vsel %vm263, %v269, %v268
        %v272 = vperm.slane %v213, 1
        %v273 = vsel %vm260, %v272, %v270
        %v274 = vsel %vm261, %v272, %v271
        %v275 = vperm.slane %v208, 1
        %v276 = vsel %vm258, %v275, %v273
        %v277 = vsel %vm259, %v275, %v274
        %v278 = vld [vmem:[%s183] sm:$0xf]
        %v279 = vld [vmem:[%s183 + $0x4] sm:$0xf]
        %v280 = vld [vmem:[%s183 + $0x8] sm:$0xf]
        %v281 = vld [vmem:[%s183 + $0xc] sm:$0xf]
        %v282 = vld [vmem:[%s183 + $0x10] sm:$0xf]
        %v283 = vld [vmem:[%s183 + $0x14] sm:$0xf]
        %v284 = vld [vmem:[%s183 + $0x18] sm:$0xf]
        %v285 = vld [vmem:[%s183 + $0x1c] sm:$0xf]
        %v286 = vpack.c.bf16 %v254, %v253
        %v295 = vunpack.c.l.b16 %v278
        %v296 = vunpack.c.l.b16 %v279
        %v297 = vunpack.c.l.b16 %v280
        %v298 = vunpack.c.l.b16 %v281
        %v299 = vunpack.c.l.b16 %v282
        %v300 = vunpack.c.l.b16 %v283
        %v301 = vunpack.c.l.b16 %v284
        %v302 = vunpack.c.l.b16 %v285
        %v303 = vpack.c.b16 %v296, %v295
        %v304 = vpack.c.b16 %v298, %v297
        %v305 = vpack.c.b16 %v300, %v299
        %v306 = vpack.c.b16 %v302, %v301
        %vm307 = vcmask 130048
        %v309 = vsel %vm307, %v303, 0
        %v312 = vsel %vm307, %v304, 0
        %v315 = vsel %vm307, %v305, 0
        %v318 = vsel %vm307, %v306, 0
        %320 = vmatpush.bf16.msra.mxu0 0
        %321 = vmatpush.bf16.msra.mxu0 0
        %322 = vmatpush.bf16.msra.mxu0 0
        %323 = vmatpush.bf16.msra.mxu0 0
        %324 = vmatpush.bf16.msra.mxu0 0
        %325 = vmatpush.bf16.msra.mxu0 0
        %326 = vmatpush.bf16.msra.mxu0 0
        %327 = vmatpush.bf16.msra.mxu0 %v286
        %328 = vmatmul.bf16.gmra.mxu0 %v309
        %v329 = vpop.f32.mrf.mxu0
        %v330 = vadd.f32 0.0, %v329
        %v331 = vpop.f32.mrf.mxu0
        %v332 = vadd.f32 0.0, %v331
        %333 = vmatmul.bf16.gmra.mxu0 %v312
        %v334 = vpop.f32.mrf.mxu0
        %v335 = vadd.f32 0.0, %v334
        %v336 = vpop.f32.mrf.mxu0
        %v337 = vadd.f32 0.0, %v336
        %338 = vmatmul.bf16.gmra.mxu0 %v315
        %v339 = vpop.f32.mrf.mxu0
        %v340 = vadd.f32 0.0, %v339
        %v341 = vpop.f32.mrf.mxu0
        %v342 = vadd.f32 0.0, %v341
        %343 = vmatmul.bf16.gmra.mxu0 %v318
        %v344 = vpop.f32.mrf.mxu0
        %v345 = vadd.f32 0.0, %v344
        %v346 = vpop.f32.mrf.mxu0
        %v347 = vadd.f32 0.0, %v346
        %348 = vdwg.mxu0
        %v349 = vpack.c.bf16 %v330, %v330
        %v350 = vpack.c.bf16 %v332, %v332
        %v351 = vpack.c.bf16 %v335, %v335
        %v352 = vpack.c.bf16 %v337, %v337
        %v353 = vpack.c.bf16 %v340, %v340
        %v354 = vpack.c.bf16 %v342, %v342
        %v355 = vpack.c.bf16 %v345, %v345
        %v356 = vpack.c.bf16 %v347, %v347
        %v357 = vpack.c.bf16 %v276, %v276
        %v358 = vpack.c.bf16 %v277, %v277
        %v359 = vunpack.c.l.bf16 %v349
        %v360 = vunpack.c.l.bf16 %v350
        %v361 = vunpack.c.l.bf16 %v351
        %v362 = vunpack.c.l.bf16 %v352
        %v363 = vunpack.c.l.bf16 %v353
        %v364 = vunpack.c.l.bf16 %v354
        %v365 = vunpack.c.l.bf16 %v355
        %v366 = vunpack.c.l.bf16 %v356
        %v367 = vunpack.c.l.bf16 %v357
        %v368 = vunpack.c.l.bf16 %v358
        %v369 = vmul.f32 %v359, %v367
        %v370 = vmul.f32 %v360, %v368
        %v371 = vmul.f32 %v361, %v367
        %v372 = vmul.f32 %v362, %v368
        %v373 = vmul.f32 %v363, %v367
        %v374 = vmul.f32 %v364, %v368
        %v375 = vmul.f32 %v365, %v367
        %v376 = vmul.f32 %v366, %v368
        %v377 = vpack.c.bf16 %v370, %v369
        %v378 = vpack.c.bf16 %v372, %v371
        %v379 = vpack.c.bf16 %v374, %v373
        %v380 = vpack.c.bf16 %v376, %v375
        %v381 = vunpack.c.l.bf16 %v377
        %v382 = vunpack.c.h.bf16 %v377
        %v383 = vunpack.c.l.bf16 %v378
        %v384 = vunpack.c.h.bf16 %v378
        %v385 = vunpack.c.l.bf16 %v379
        %v386 = vunpack.c.h.bf16 %v379
        %v387 = vunpack.c.l.bf16 %v380
        %v388 = vunpack.c.h.bf16 %v380
        %v389 = vadd.f32 %v381, %v382
        %v390 = vrot.slane %v389, 4
        %v391 = vadd.f32 %v389, %v390
        %v392 = vrot.slane %v391, 2
        %v393 = vadd.f32 %v391, %v392
        %v394 = vrot.slane %v393, 1
        %v395 = vadd.f32 %v393, %v394
        %v396 = vadd.f32 %v383, %v384
        %v397 = vrot.slane %v396, 4
        %v398 = vadd.f32 %v396, %v397
        %v399 = vrot.slane %v398, 2
        %v400 = vadd.f32 %v398, %v399
        %v401 = vrot.slane %v400, 1
        %v402 = vadd.f32 %v400, %v401
        %v403 = vadd.f32 %v385, %v386
        %v404 = vrot.slane %v403, 4
        %v405 = vadd.f32 %v403, %v404
        %v406 = vrot.slane %v405, 2
        %v407 = vadd.f32 %v405, %v406
        %v408 = vrot.slane %v407, 1
        %v409 = vadd.f32 %v407, %v408
        %v410 = vadd.f32 %v387, %v388
        %v411 = vrot.slane %v410, 4
        %v412 = vadd.f32 %v410, %v411
        %v413 = vrot.slane %v412, 2
        %v414 = vadd.f32 %v412, %v413
        %v415 = vrot.slane %v414, 1
        %v416 = vadd.f32 %v414, %v415
        %vm421 = vcmask 1041409
        %v422 = vsel %vm421, %v402, %v395
        %vm423 = vcmask 1042434
        %v424 = vsel %vm423, %v409, %v422
        %vm425 = vcmask 1043459
        %v426 = vsel %vm425, %v416, %v424
        %428 = vst [vmem:[%s171] sm:$0xf] %v426
        %s429 = sand.u32 %s92, 1
        %s430 = scalar_lea.sflag [#allocation3], %s429
        %s431 = sand.u32 %s92, 1
        %s432 = smul.addr %s431, 4
        %s433 = scalar_lea.vmem [#allocation2], %s432
        // Predicated region
        $region29: #{tpu_custom_call.1} parent=27 // pred_check
          %p434 = pneg %p102
        $region30: #{tpu_custom_call.1} parent=27 // pred_check_branch
          %436 = sbr.rel (%p434) target = $region32
        $region31: #{tpu_custom_call.1} parent=27 // pred_region
          %438 = vsyncadd %s430, 0
          %s439 = sadd.s32 %s21, %s20
          %s440 = smul.addr %s439, 4
          %s441 = scalar_lea.hbm %s2, %s440
          %s443 = sshll.u32 %s433, 4
          %s444 = int_to_ptr.vmem [resolvable:$true] %s443
          %s445 = sshll.u32 %s441, 4
          %s446 = int_to_ptr.hbm [resolvable:$true] %s445
          %448 = dma.vmem_to_hbm [thread:$0]  %s444, 64, %s446, %s430
        $region32: #{tpu_custom_call.1} parent=27 // pred_fallthru
          _
      $region28: #{tpu_custom_call.1} parent=5 // pred_fallthru
        _
      %p449 = scmp.le.s32.totalorder 2, %s11
      // Predicated region
      $region33: #{tpu_custom_call.1} parent=5 // pred_check
        %p450 = pneg %p449
      $region34: #{tpu_custom_call.1} parent=5 // pred_check_branch
        %452 = sbr.rel (%p450) target = $region36
      $region35: #{tpu_custom_call.1} parent=5 // pred_region
        %s453 = ssub.s32 %s11, 2
        // Predicated region
        $region37: #{tpu_custom_call.1} parent=35 // pred_check
          %p454 = pneg %p108
        $region38: #{tpu_custom_call.1} parent=35 // pred_check_branch
          %456 = sbr.rel (%p454) target = $region40
        $region39: #{tpu_custom_call.1} parent=35 // pred_region
          %s457 = sand.u32 %s93, 1
          %s458 = scalar_lea.sflag [#allocation3], %s457
          %s459 = sand.u32 %s93, 1
          %s460 = smul.addr %s459, 4
          %s461 = scalar_lea.vmem [#allocation2], %s460
          %463 = dma.done %s458, 64
        $region40: #{tpu_custom_call.1} parent=35 // pred_fallthru
          _
      $region36: #{tpu_custom_call.1} parent=5 // pred_fallthru
        _
    $region6: #{tpu_custom_call.1} parent=1 // loop_footer
      %s15 = sadd.s32 1, %s11
    $region7: #{tpu_custom_call.1} parent=1 // loop_footer_branch
      %10 = sbr.rel target = $region3
    $region8: #{tpu_custom_call.1} parent=1 // loop_exit
      _
    %464 = vsyncpa [#allocation3], 1
    %s465 = scalar_lea.sflag [#allocation3], 1
    %466 = vsyncpa %s465, 1

// kernel: tpu_custom_call.1
$region0: #{tpu_custom_call.1}
  #allocation0 [shape = 'u32[]', space=smem, size = 0x4, offset = 0x4, fixed_abs, tag = 'smem constant byte address 0x4 - core index']
  #allocation1 [shape = 'u32[72,128]{1,0:T(1,128)}', space=vmem, size = 0x9000, scoped, tag = 'internal scratch']
  %s0 = inlined_call_operand.vmem [shape: f32[2,2,128], index: 0, kind: input, shape index: {}]
  %s1 = inlined_call_operand.vmem [shape: bf16[2,64,16], index: 1, kind: input, shape index: {}]
  %s2 = inlined_call_operand.hbm [shape: f32[2,4,128], index: 2, kind: output, shape index: {}]
  %s3 = sld [smem:[#allocation0]]
  $region41: #{tpu_custom_call.1} parent=0
    _
  %s5 = ssub.s32 1, %s3
  %s6 = scalar_select 0, %s5, %s3
  $region1: #{tpu_custom_call.1} parent=0
    #allocation2 [shape = 'u8[4096]{0}', space=vmem, size = 0x1000, scoped, tag = 'output window, operand 0']
    #allocation3 [shape = 's32[2]{0}', space=sflag, size = 0x8, scoped, tag = 'scoped memory for tpu_custom_call.1']
    %7 = vsyncpa [#allocation3], 0
    %s8 = scalar_lea.sflag [#allocation3], 1
    %9 = vsyncpa %s8, 0
    loop: start=0, step=1, limit=4
    $region2: #{tpu_custom_call.1} parent=1 // loop_pre_header
      _
    $region3: #{tpu_custom_call.1} parent=1 // loop_header
      %s11 = sphi 0, %s15
      %p12 = scmp.ge.s32.totalorder %s11, 4
      %s18 = sphi 0, %s30
      %s19 = sphi 0, %s26
      %s20 = sphi 0, %s18
      %s21 = sphi 0, %s19
      %s22 = sphi 0, %s20
      %s23 = sphi 0, %s21
      %s35 = sphi 0, %s37
      %s38 = sphi 0, %s35
      %s39 = sphi 0, %s38
      %s55 = sphi 0, %s39
      %s61 = sphi 0, %s63
      %s64 = sphi 0, %s61
      %s65 = sphi 0, %s64
      %s81 = sphi 0, %s65
      %s89 = sphi 0, %s91
      %s92 = sphi 0, %s89
      %s93 = sphi 0, %s92
      %s109 = sphi 0, %s93
    $region4: #{tpu_custom_call.1} parent=1 // loop_header_branch
      %14 = sbr.rel (%p12) target = $region8
    $region5: #{tpu_custom_call.1} parent=1 // loop_body
      %s16 = ssub.s32 %s11, 1
      %s17 = ssub.s32 %s11, 2
      %s24 = sadd.s32 1, %s19
      %p25 = scmp.ge.s32.totalorder %s24, 1
      %s26 = scalar_select %p25, 0, %s24
      %s27 = sadd.s32 1, %s18
      %s28 = scalar_select %p25, %s27, %s18
      %p29 = scmp.ge.s32.totalorder %s28, 2
      %s30 = scalar_select %p29, 0, %s28
      %s31 = ssub.s32 %s18, %s30
      %s32 = ssub.s32 %s19, %s26
      %s33 = sor.u32 %s31, %s32
      %p34 = scmp.eq.s32.totalorder %s33, 0
      %s36 = sadd.s32 %s35, 1
      %s37 = scalar_select %p34, %s35, %s36
      %p40 = pneg %p34
      %p41 = scmp.eq.s32.totalorder %s11, 1
      %p42 = por %p40, %p41
      %p43 = scmp.ne.s32.totalorder %s35, %s38
      %p44 = scmp.eq.s32.totalorder %s11, 0
      %p45 = por %p43, %p44
      %p46 = scmp.ne.s32.totalorder %s35, %s38
      %p47 = scmp.eq.s32.totalorder %s16, 1
      %p48 = por %p46, %p47
      %p49 = scmp.ne.s32.totalorder %s38, %s39
      %p50 = scmp.eq.s32.totalorder %s16, 0
      %p51 = por %p49, %p50
      %p52 = scmp.ne.s32.totalorder %s38, %s39
      %p53 = scmp.eq.s32.totalorder %s17, 1
      %p54 = por %p52, %p53
      %p56 = scmp.ne.s32.totalorder %s39, %s55
      %p57 = scmp.eq.s32.totalorder %s17, 0
      %p58 = por %p56, %p57
      %s59 = ssub.s32 %s18, %s30
      %p60 = scmp.eq.s32.totalorder %s59, 0
      %s62 = sadd.s32 %s61, 1
      %s63 = scalar_select %p60, %s61, %s62
      %p66 = pneg %p60
      %p67 = scmp.eq.s32.totalorder %s11, 1
      %p68 = por %p66, %p67
      %p69 = scmp.ne.s32.totalorder %s61, %s64
      %p70 = scmp.eq.s32.totalorder %s11, 0
      %p71 = por %p69, %p70
      %p72 = scmp.ne.s32.totalorder %s61, %s64
      %p73 = scmp.eq.s32.totalorder %s16, 1
      %p74 = por %p72, %p73
      %p75 = scmp.ne.s32.totalorder %s64, %s65
      %p76 = scmp.eq.s32.totalorder %s16, 0
      %p77 = por %p75, %p76
      %p78 = scmp.ne.s32.totalorder %s64, %s65
      %p79 = scmp.eq.s32.totalorder %s17, 1
      %p80 = por %p78, %p79
      %p82 = scmp.ne.s32.totalorder %s65, %s81
      %p83 = scmp.eq.s32.totalorder %s17, 0
      %p84 = por %p82, %p83
      %s85 = ssub.s32 %s18, %s30
      %s86 = ssub.s32 %s19, %s26
      %s87 = sor.u32 %s85, %s86
      %p88 = scmp.eq.s32.totalorder %s87, 0
      %s90 = sadd.s32 %s89, 1
      %s91 = scalar_select %p88, %s89, %s90
      %p94 = pneg %p88
      %p95 = scmp.eq.s32.totalorder %s11, 1
      %p96 = por %p94, %p95
      %p97 = scmp.ne.s32.totalorder %s89, %s92
      %p98 = scmp.eq.s32.totalorder %s11, 0
      %p99 = por %p97, %p98
      %p100 = scmp.ne.s32.totalorder %s89, %s92
      %p101 = scmp.eq.s32.totalorder %s16, 1
      %p102 = por %p100, %p101
      %p103 = scmp.ne.s32.totalorder %s92, %s93
      %p104 = scmp.eq.s32.totalorder %s16, 0
      %p105 = por %p103, %p104
      %p106 = scmp.ne.s32.totalorder %s92, %s93
      %p107 = scmp.eq.s32.totalorder %s17, 1
      %p108 = por %p106, %p107
      %p110 = scmp.ne.s32.totalorder %s93, %s109
      %p111 = scmp.eq.s32.totalorder %s17, 0
      %p112 = por %p110, %p111
      %p113 = scmp.le.s32.totalorder 1, %s11
      %p114 = scmp.lt.s32.totalorder %s11, 3
      %p115 = pnand %p113, %p114
      %p116 = pneg %p115
      // Predicated region
      $region9: #{tpu_custom_call.1} parent=5 // pred_check
        _
      $region10: #{tpu_custom_call.1} parent=5 // pred_check_branch
        %118 = sbr.rel (%p115) target = $region12
      $region11: #{tpu_custom_call.1} parent=5 // pred_region
        %s119 = ssub.s32 %s11, 1
      $region12: #{tpu_custom_call.1} parent=5 // pred_fallthru
        _
      %p120 = scmp.lt.s32.totalorder %s11, 2
      // Predicated region
      $region13: #{tpu_custom_call.1} parent=5 // pred_check
        %p121 = pneg %p120
      $region14: #{tpu_custom_call.1} parent=5 // pred_check_branch
        %123 = sbr.rel (%p121) target = $region16
      $region15: #{tpu_custom_call.1} parent=5 // pred_region
        // Predicated region
        $region17: #{tpu_custom_call.1} parent=15 // pred_check
          %p124 = pneg %p45
        $region18: #{tpu_custom_call.1} parent=15 // pred_check_branch
          %126 = sbr.rel (%p124) target = $region20
        $region19: #{tpu_custom_call.1} parent=15 // pred_region
          %p127 = scmp.lt.s32.totalorder %s18, 1
          %s128 = scalar_select %p127, %s18, 1
          %p129 = scmp.lt.s32.totalorder %s19, 0
          %s130 = scalar_select %p129, %s19, 0
          %s131 = sadd.s32 %s130, %s128
          %s132 = smul.addr %s131, 2
          %s133 = scalar_lea.vmem %s0, %s132
        $region20: #{tpu_custom_call.1} parent=15 // pred_fallthru
          _
        // Predicated region
        $region21: #{tpu_custom_call.1} parent=15 // pred_check
          %p134 = pneg %p71
        $region22: #{tpu_custom_call.1} parent=15 // pred_check_branch
          %136 = sbr.rel (%p134) target = $region24
        $region23: #{tpu_custom_call.1} parent=15 // pred_region
          %p137 = scmp.lt.s32.totalorder %s18, 1
          %s138 = scalar_select %p137, %s18, 1
          %s139 = smul.addr %s138, 8
          %s140 = smul.addr %s139, 4
          %s141 = scalar_lea.vmem %s1, %s140
        $region24: #{tpu_custom_call.1} parent=15 // pred_fallthru
          _
      $region16: #{tpu_custom_call.1} parent=5 // pred_fallthru
        _
      %p142 = scmp.le.s32.totalorder 1, %s11
      %p143 = scmp.lt.s32.totalorder %s11, 3
      %p144 = pnand %p142, %p143
      %p145 = pneg %p144
      // Predicated region
      $region25: #{tpu_custom_call.1} parent=5 // pred_check
        _
      $region26: #{tpu_custom_call.1} parent=5 // pred_check_branch
        %147 = sbr.rel (%p144) target = $region28
      $region27: #{tpu_custom_call.1} parent=5 // pred_region
        %s148 = ssub.s32 %s11, 1
        %p149 = scmp.lt.s32.totalorder %s20, 1
        %s150 = scalar_select %p149, %s20, 1
        %p151 = scmp.lt.s32.totalorder %s21, 0
        %s152 = scalar_select %p151, %s21, 0
        %s153 = sadd.s32 %s152, %s150
        %s154 = smul.addr %s153, 2
        %s155 = scalar_lea.vmem %s0, %s154
        %p156 = pneg %p51
        %p157 = pneg %p48
        %p158 = scmp.lt.s32.totalorder %s20, 1
        %s159 = scalar_select %p158, %s20, 1
        %s160 = smul.addr %s159, 8
        %s161 = smul.addr %s160, 4
        %s162 = scalar_lea.vmem %s1, %s161
        %p163 = pneg %p77
        %p164 = pneg %p74
        %p165 = pneg %p105
        %p166 = pneg %p102
        %s167 = sand.u32 %s92, 1
        %s168 = scalar_lea.sflag [#allocation3], %s167
        %s169 = sand.u32 %s92, 1
        %s170 = smul.addr %s169, 4
        %s171 = scalar_lea.vmem [#allocation2], %s170
        %p172 = scmp.lt.s32.totalorder %s20, 1
        %s173 = scalar_select %p172, %s20, 1
        %p174 = scmp.lt.s32.totalorder %s21, 0
        %s175 = scalar_select %p174, %s21, 0
        %s176 = sadd.s32 %s175, %s173
        %s177 = smul.addr %s176, 2
        %s178 = scalar_lea.vmem %s0, %s177
        %p179 = scmp.lt.s32.totalorder %s20, 1
        %s180 = scalar_select %p179, %s20, 1
        %s181 = smul.addr %s180, 8
        %s182 = smul.addr %s181, 4
        %s183 = scalar_lea.vmem %s1, %s182
        %v185 = vld [vmem:[%s178] sm:$0x3]
        %v186 = vmul.f32 %v185, 2.0
        %v187 = vrcp.pop 15.0
        %v188 = vmul.f32 15.0, %v187
        %v189 = vsub.f32 1.0, %v188
        %v190 = vmul.f32 %v187, %v189
        %v191 = vadd.f32 %v187, %v190
        %vm192 = vweird.f32 %v187
        %v193 = vsel %vm192, %v187, %v191
        %v194 = vmul.f32 %v186, %v193
        %v195 = vsub.f32 %v194, 1.0
        %v196 = vadd.f32 %v195, 1.0
        %v197 = vmul.f32 %v196, 16.0
        %v198 = vsub.f32 %v197, 1.0
        %v199 = vmul.f32 %v198, 0.5
        %v200 = vfloor.f32 %v199
        %v201 = vsub.f32 %v199, %v200
        %v202 = vadd.f32 %v201, 1.0
        %v203 = vmul.f32 %v202, -0.75
        %v204 = vsub.f32 %v203, -3.75
        %v205 = vmul.f32 %v204, %v202
        %v206 = vadd.f32 %v205, -6.0
        %v207 = vmul.f32 %v206, %v202
        %v208 = vsub.f32 %v207, -3.0
        %v209 = vmul.f32 %v201, 1.25
        %v210 = vsub.f32 %v209, 2.25
        %v211 = vmul.f32 %v210, %v201
        %v212 = vmul.f32 %v211, %v201
        %v213 = vadd.f32 %v212, 1.0
        %v214 = vsub.f32 1.0, %v201
        %v215 = vmul.f32 %v214, 1.25
        %v216 = vsub.f32 %v215, 2.25
        %v217 = vmul.f32 %v216, %v214
        %v218 = vmul.f32 %v217, %v214
        %v219 = vadd.f32 %v218, 1.0
        %v220 = vsub.f32 2.0, %v201
        %v221 = vmul.f32 %v220, -0.75
        %v222 = vsub.f32 %v221, -3.75
        %v223 = vmul.f32 %v222, %v220
        %v224 = vadd.f32 %v223, -6.0
        %v225 = vmul.f32 %v224, %v220
        %v226 = vsub.f32 %v225, -3.0
        %v227 = vcvt.f32.s32.to.zero.pseudo %v200
        %v228 = vsub.s32 %v227, 1
        %v229 = vlaneseq
        %v230 = vshrl.u32 %v229, 7
        %v231 = vadd.s32 %v230, 8
        %v232 = vperm.slane %v228, 0
        %v233 = vsub.s32 %v230, %v232
        %v234 = vsub.s32 %v231, %v232
        %vm235 = vcmp.eq.s32.totalorder %v233, 0
        %vm236 = vcmp.eq.s32.totalorder %v234, 0
        %vm237 = vcmp.eq.s32.totalorder %v233, 1
        %vm238 = vcmp.eq.s32.totalorder %v234, 1
        %vm239 = vcmp.eq.s32.totalorder %v233, 2
        %vm240 = vcmp.eq.s32.totalorder %v234, 2
        %vm241 = vcmp.eq.s32.totalorder %v233, 3
        %vm242 = vcmp.eq.s32.totalorder %v234, 3
        %v243 = vperm.slane %v226, 0
        %v244 = vsel %vm241, %v243, 0.0
        %v245 = vsel %vm242, %v243, 0.0
        %v246 = vperm.slane %v219, 0
        %v247 = vsel %vm239, %v246, %v244
        %v248 = vsel %vm240, %v246, %v245
        %v249 = vperm.slane %v213, 0
        %v250 = vsel %vm237, %v249, %v247
        %v251 = vsel %vm238, %v249, %v248
        %v252 = vperm.slane %v208, 0
        %v253 = vsel %vm235, %v252, %v250
        %v254 = vsel %vm236, %v252, %v251
        %v255 = vperm.slane %v228, 1
        %v256 = vsub.s32 %v230, %v255
        %v257 = vsub.s32 %v231, %v255
        %vm258 = vcmp.eq.s32.totalorder %v256, 0
        %vm259 = vcmp.eq.s32.totalorder %v257, 0
        %vm260 = vcmp.eq.s32.totalorder %v256, 1
        %vm261 = vcmp.eq.s32.totalorder %v257, 1
        %vm262 = vcmp.eq.s32.totalorder %v256, 2
        %vm263 = vcmp.eq.s32.totalorder %v257, 2
        %vm264 = vcmp.eq.s32.totalorder %v256, 3
        %vm265 = vcmp.eq.s32.totalorder %v257, 3
        %v266 = vperm.slane %v226, 1
        %v267 = vsel %vm264, %v266, 0.0
        %v268 = vsel %vm265, %v266, 0.0
        %v269 = vperm.slane %v219, 1
        %v270 = vsel %vm262, %v269, %v267
        %v271 = vsel %vm263, %v269, %v268
        %v272 = vperm.slane %v213, 1
        %v273 = vsel %vm260, %v272, %v270
        %v274 = vsel %vm261, %v272, %v271
        %v275 = vperm.slane %v208, 1
        %v276 = vsel %vm258, %v275, %v273
        %v277 = vsel %vm259, %v275, %v274
        %v278 = vld [vmem:[%s183] sm:$0xf]
        %v279 = vld [vmem:[%s183 + $0x4] sm:$0xf]
        %v280 = vld [vmem:[%s183 + $0x8] sm:$0xf]
        %v281 = vld [vmem:[%s183 + $0xc] sm:$0xf]
        %v282 = vld [vmem:[%s183 + $0x10] sm:$0xf]
        %v283 = vld [vmem:[%s183 + $0x14] sm:$0xf]
        %v284 = vld [vmem:[%s183 + $0x18] sm:$0xf]
        %v285 = vld [vmem:[%s183 + $0x1c] sm:$0xf]
        %v286 = vpack.c.bf16 %v254, %v253
        %v295 = vunpack.c.l.b16 %v278
        %v296 = vunpack.c.l.b16 %v279
        %v297 = vunpack.c.l.b16 %v280
        %v298 = vunpack.c.l.b16 %v281
        %v299 = vunpack.c.l.b16 %v282
        %v300 = vunpack.c.l.b16 %v283
        %v301 = vunpack.c.l.b16 %v284
        %v302 = vunpack.c.l.b16 %v285
        %v303 = vpack.c.b16 %v296, %v295
        %v304 = vpack.c.b16 %v298, %v297
        %v305 = vpack.c.b16 %v300, %v299
        %v306 = vpack.c.b16 %v302, %v301
        %vm307 = vcmask 130048
        %v309 = vsel %vm307, %v303, 0
        %v312 = vsel %vm307, %v304, 0
        %v315 = vsel %vm307, %v305, 0
        %v318 = vsel %vm307, %v306, 0
        %320 = vmatpush.bf16.msra.mxu0 0
        %321 = vmatpush.bf16.msra.mxu0 0
        %322 = vmatpush.bf16.msra.mxu0 0
        %323 = vmatpush.bf16.msra.mxu0 0
        %324 = vmatpush.bf16.msra.mxu0 0
        %325 = vmatpush.bf16.msra.mxu0 0
        %326 = vmatpush.bf16.msra.mxu0 0
        %327 = vmatpush.bf16.msra.mxu0 %v286
        %328 = vmatmul.bf16.gmra.mxu0 %v309
        %v329 = vpop.f32.mrf.mxu0
        %v330 = vadd.f32 0.0, %v329
        %v331 = vpop.f32.mrf.mxu0
        %v332 = vadd.f32 0.0, %v331
        %333 = vmatmul.bf16.gmra.mxu0 %v312
        %v334 = vpop.f32.mrf.mxu0
        %v335 = vadd.f32 0.0, %v334
        %v336 = vpop.f32.mrf.mxu0
        %v337 = vadd.f32 0.0, %v336
        %338 = vmatmul.bf16.gmra.mxu0 %v315
        %v339 = vpop.f32.mrf.mxu0
        %v340 = vadd.f32 0.0, %v339
        %v341 = vpop.f32.mrf.mxu0
        %v342 = vadd.f32 0.0, %v341
        %343 = vmatmul.bf16.gmra.mxu0 %v318
        %v344 = vpop.f32.mrf.mxu0
        %v345 = vadd.f32 0.0, %v344
        %v346 = vpop.f32.mrf.mxu0
        %v347 = vadd.f32 0.0, %v346
        %348 = vdwg.mxu0
        %v349 = vpack.c.bf16 %v330, %v330
        %v350 = vpack.c.bf16 %v332, %v332
        %v351 = vpack.c.bf16 %v335, %v335
        %v352 = vpack.c.bf16 %v337, %v337
        %v353 = vpack.c.bf16 %v340, %v340
        %v354 = vpack.c.bf16 %v342, %v342
        %v355 = vpack.c.bf16 %v345, %v345
        %v356 = vpack.c.bf16 %v347, %v347
        %v357 = vpack.c.bf16 %v276, %v276
        %v358 = vpack.c.bf16 %v277, %v277
        %v359 = vunpack.c.l.bf16 %v349
        %v360 = vunpack.c.l.bf16 %v350
        %v361 = vunpack.c.l.bf16 %v351
        %v362 = vunpack.c.l.bf16 %v352
        %v363 = vunpack.c.l.bf16 %v353
        %v364 = vunpack.c.l.bf16 %v354
        %v365 = vunpack.c.l.bf16 %v355
        %v366 = vunpack.c.l.bf16 %v356
        %v367 = vunpack.c.l.bf16 %v357
        %v368 = vunpack.c.l.bf16 %v358
        %v369 = vmul.f32 %v359, %v367
        %v370 = vmul.f32 %v360, %v368
        %v371 = vmul.f32 %v361, %v367
        %v372 = vmul.f32 %v362, %v368
        %v373 = vmul.f32 %v363, %v367
        %v374 = vmul.f32 %v364, %v368
        %v375 = vmul.f32 %v365, %v367
        %v376 = vmul.f32 %v366, %v368
        %v377 = vpack.c.bf16 %v370, %v369
        %v378 = vpack.c.bf16 %v372, %v371
        %v379 = vpack.c.bf16 %v374, %v373
        %v380 = vpack.c.bf16 %v376, %v375
        %v381 = vunpack.c.l.bf16 %v377
        %v382 = vunpack.c.h.bf16 %v377
        %v383 = vunpack.c.l.bf16 %v378
        %v384 = vunpack.c.h.bf16 %v378
        %v385 = vunpack.c.l.bf16 %v379
        %v386 = vunpack.c.h.bf16 %v379
        %v387 = vunpack.c.l.bf16 %v380
        %v388 = vunpack.c.h.bf16 %v380
        %v389 = vadd.f32 %v381, %v382
        %v390 = vrot.slane %v389, 4
        %v391 = vadd.f32 %v389, %v390
        %v392 = vrot.slane %v391, 2
        %v393 = vadd.f32 %v391, %v392
        %v394 = vrot.slane %v393, 1
        %v395 = vadd.f32 %v393, %v394
        %v396 = vadd.f32 %v383, %v384
        %v397 = vrot.slane %v396, 4
        %v398 = vadd.f32 %v396, %v397
        %v399 = vrot.slane %v398, 2
        %v400 = vadd.f32 %v398, %v399
        %v401 = vrot.slane %v400, 1
        %v402 = vadd.f32 %v400, %v401
        %v403 = vadd.f32 %v385, %v386
        %v404 = vrot.slane %v403, 4
        %v405 = vadd.f32 %v403, %v404
        %v406 = vrot.slane %v405, 2
        %v407 = vadd.f32 %v405, %v406
        %v408 = vrot.slane %v407, 1
        %v409 = vadd.f32 %v407, %v408
        %v410 = vadd.f32 %v387, %v388
        %v411 = vrot.slane %v410, 4
        %v412 = vadd.f32 %v410, %v411
        %v413 = vrot.slane %v412, 2
        %v414 = vadd.f32 %v412, %v413
        %v415 = vrot.slane %v414, 1
        %v416 = vadd.f32 %v414, %v415
        %vm421 = vcmask 1041409
        %v422 = vsel %vm421, %v402, %v395
        %vm423 = vcmask 1042434
        %v424 = vsel %vm423, %v409, %v422
        %vm425 = vcmask 1043459
        %v426 = vsel %vm425, %v416, %v424
        %428 = vst [vmem:[%s171] sm:$0xf] %v426
        %s429 = sand.u32 %s92, 1
        %s430 = scalar_lea.sflag [#allocation3], %s429
        %s431 = sand.u32 %s92, 1
        %s432 = smul.addr %s431, 4
        %s433 = scalar_lea.vmem [#allocation2], %s432
        // Predicated region
        $region29: #{tpu_custom_call.1} parent=27 // pred_check
          %p434 = pneg %p102
        $region30: #{tpu_custom_call.1} parent=27 // pred_check_branch
          %436 = sbr.rel (%p434) target = $region32
        $region31: #{tpu_custom_call.1} parent=27 // pred_region
          %438 = vsyncadd %s430, 0
          %s439 = sadd.s32 %s21, %s20
          %s440 = smul.addr %s439, 4
          %s441 = scalar_lea.hbm %s2, %s440
          %s443 = sshll.u32 %s433, 4
          %s444 = int_to_ptr.vmem [resolvable:$true] %s443
          %s445 = sshll.u32 %s441, 4
          %s446 = int_to_ptr.hbm [resolvable:$true] %s445
          %448 = dma.vmem_to_hbm [thread:$0]  %s444, 64, %s446, %s430
        $region32: #{tpu_custom_call.1} parent=27 // pred_fallthru
          _
      $region28: #{tpu_custom_call.1} parent=5 // pred_fallthru
        _
      %p449 = scmp.le.s32.totalorder 2, %s11
      // Predicated region
      $region33: #{tpu_custom_call.1} parent=5 // pred_check
        %p450 = pneg %p449
      $region34: #{tpu_custom_call.1} parent=5 // pred_check_branch
        %452 = sbr.rel (%p450) target = $region36
      $region35: #{tpu_custom_call.1} parent=5 // pred_region
        %s453 = ssub.s32 %s11, 2
        // Predicated region
        $region37: #{tpu_custom_call.1} parent=35 // pred_check
          %p454 = pneg %p108
        $region38: #{tpu_custom_call.1} parent=35 // pred_check_branch
          %456 = sbr.rel (%p454) target = $region40
        $region39: #{tpu_custom_call.1} parent=35 // pred_region
          %s457 = sand.u32 %s93, 1
          %s458 = scalar_lea.sflag [#allocation3], %s457
          %s459 = sand.u32 %s93, 1
          %s460 = smul.addr %s459, 4
          %s461 = scalar_lea.vmem [#allocation2], %s460
          %463 = dma.done %s458, 64
        $region40: #{tpu_custom_call.1} parent=35 // pred_fallthru
          _
      $region36: #{tpu_custom_call.1} parent=5 // pred_fallthru
        _
    $region6: #{tpu_custom_call.1} parent=1 // loop_footer
      %s15 = sadd.s32 1, %s11
    $region7: #{tpu_custom_call.1} parent=1 // loop_footer_branch
      %10 = sbr.rel target = $region3
    $region8: #{tpu_custom_call.1} parent=1 // loop_exit
      _
    %464 = vsyncpa [#allocation3], 1
    %s465 = scalar_lea.sflag [#allocation3], 1
    %466 = vsyncpa %s465, 1

</llo_original>
